<compile_context>
chip_gen: v5e
topology: v5e:2x2
jax: 0.10.0
libtpu: 0.0.40
codegen_flags: <defaults>
</compile_context>

<pallas_src>
import functools

import jax
import jax.numpy as jnp
from jax import lax
from jax.experimental import pallas as pl
from jax.experimental.pallas import tpu as pltpu


def _round_up(x, m):
    return (x + m - 1) // m * m


# ------------------------------ fused kernel ------------------------------- #
def _downblock_kernel(M, Wp, offs_d, offs_c,
                      xs_ref, wd_ref, w1_ref, w2_ref, b_ref, mask_ref,
                      out_ref, p1_ref, p2_ref):
    """One batch image per grid step; the three convs are fused and both
    intermediate activations stay in VMEM scratch.

    Every conv works on a flattened, spatially padded activation of row
    width Wp: stencil tap (dy, dx) is the static slice [o : o + M] at
    o = dy*Wp + dx.  Taps are lane-concatenated and fed to a single deep
    bf16 MXU dot per layer (f32 accumulation); the epilogue is add-bias +
    ReLU (BN scale already folded into the weights)."""
    mask = mask_ref[...]                                   # (M, 1) f32

    # Padded intermediate buffers: border rows/cols must be exact zeros.
    p1_ref[...] = jnp.zeros_like(p1_ref)
    p2_ref[...] = jnp.zeros_like(p2_ref)

    def conv(in_ref, w_ref, bias_row, offs):
        xcat = jnp.concatenate([in_ref[o:o + M, :] for o in offs], axis=1)
        acc = jnp.dot(xcat.astype(jnp.bfloat16), w_ref[...],
                      preferred_element_type=jnp.float32)
        return jnp.maximum(acc + b_ref[bias_row:bias_row + 1, :], 0.0)

    # down conv: stride-2 3x3 == 2x2 taps over the space-to-depth'd input.
    y = conv(xs_ref, wd_ref, 0, offs_d) * mask
    p1_ref[Wp + 1:Wp + 1 + M, :] = y

    # cv1
    y = conv(p1_ref, w1_ref, 1, offs_c) * mask
    p2_ref[Wp + 1:Wp + 1 + M, :] = y

    # cv2 -- garbage flat columns are sliced off at the model boundary.
    y = conv(p2_ref, w2_ref, 2, offs_c)
    out_ref[...] = y.astype(out_ref.dtype)


# ------------------------------- JAX glue ---------------------------------- #
def downblock_pallas(x_nhwc, p):
    """Fused DownBlock forward: NHWC (N,H,W,Cin) -> NHWC (N,H/2,W/2,Cout)."""
    N, H, W, Cin = x_nhwc.shape
    Cout = p["w_down"].shape[-1]
    assert H % 2 == 0 and W % 2 == 0, "stride-2 down conv expects even H, W"

    Ho, Wo = H // 2, W // 2
    Wp = Wo + 2                       # flattened row width shared by all convs
    Hs = Ho + 1                       # space-to-depth image height
    M = Ho * Wp                       # flat rows per conv (2 garbage cols/row)
    C = _round_up(Cout, 128)          # lane-padded channel width
    Kd = _round_up(4 * Cin, 128)      # lane-padded s2d depth
    R_in = _round_up(Hs * Wp + 8, 8)
    R_mid = _round_up((Ho + 2) * Wp + 8, 8)

    f32, bf16 = jnp.float32, jnp.bfloat16

    # --- input: pad + space-to-depth + flatten (1x traffic; replaces 9x im2col)
    xpad = jnp.pad(x_nhwc, ((0, 0), (1, 1), (1, 3), (0, 0)))
    xs = xpad.reshape(N, Hs, 2, Wp, 2, Cin).transpose(0, 1, 3, 2, 4, 5)
    xs = xs.reshape(N, Hs * Wp, 4 * Cin)
    xs = jnp.pad(xs, ((0, 0), (0, R_in - Hs * Wp), (0, Kd - 4 * Cin)))
    xs = xs.astype(f32)

    # --- weights: fold BN scale, rearrange taps, lane-pad, cast bf16
    def fold(w, s):
        return w * s[None, None, None, :]

    # down conv: 3x3/stride-2 -> 2x2 taps over (p, q, c) s2d depth
    wd = fold(p["w_down"], p["s_down"])                       # (3,3,Cin,Cout)
    wd = jnp.pad(wd, ((0, 1), (0, 1), (0, 0), (0, 0)))        # (4,4,Cin,Cout)
    wd = wd.reshape(2, 2, 2, 2, Cin, Cout).transpose(0, 2, 1, 3, 4, 5)
    wd = wd.reshape(4, 4 * Cin, Cout)
    wd = jnp.pad(wd, ((0, 0), (0, Kd - 4 * Cin), (0, C - Cout)))
    wd = wd.reshape(4 * Kd, C).astype(bf16)

    def prep3x3(w, s):
        cin = w.shape[2]
        wf = fold(w, s).reshape(9, cin, Cout)
        wf = jnp.pad(wf, ((0, 0), (0, C - cin), (0, C - Cout)))
        return wf.reshape(9 * C, C).astype(bf16)

    w1 = prep3x3(p["w_cv1"], p["s_cv1"])
    w2 = prep3x3(p["w_cv2"], p["s_cv2"])

    bias = jnp.stack([p["b_down"], p["b_cv1"], p["b_cv2"]], axis=0)
    bias = jnp.pad(bias, ((0, 0), (0, C - Cout))).astype(f32)

    # validity mask over flattened rows: (m mod Wp) < Wo
    col = jnp.arange(M, dtype=jnp.int32) % Wp
    mask = (col < Wo).astype(f32).reshape(M, 1)

    offs_d = tuple(di * Wp + dj for di in range(2) for dj in range(2))
    offs_c = tuple(ky * Wp + kx for ky in range(3) for kx in range(3))

    kernel = functools.partial(_downblock_kernel, M, Wp, offs_d, offs_c)

    flops = 2 * N * M * C * (4 * Kd + 18 * C)
    bytes_accessed = int(4 * xs.size + 2 * (wd.size + w1.size + w2.size)
                         + 4 * (bias.size + mask.size) + 2 * N * M * C)

    out_flat = pl.pallas_call(
        kernel,
        out_shape=jax.ShapeDtypeStruct((N, M, C), bf16),
        grid_spec=pltpu.PrefetchScalarGridSpec(
            num_scalar_prefetch=0,
            grid=(N,),
            in_specs=[
                pl.BlockSpec((None, R_in, Kd), lambda n: (n, 0, 0)),
                pl.BlockSpec((4 * Kd, C), lambda n: (0, 0)),
                pl.BlockSpec((9 * C, C), lambda n: (0, 0)),
                pl.BlockSpec((9 * C, C), lambda n: (0, 0)),
                pl.BlockSpec((3, C), lambda n: (0, 0)),
                pl.BlockSpec((M, 1), lambda n: (0, 0)),
            ],
            out_specs=pl.BlockSpec((None, M, C), lambda n: (n, 0, 0)),
            scratch_shapes=[pltpu.VMEM((R_mid, C), f32),
                            pltpu.VMEM((R_mid, C), f32)],
        ),
        compiler_params=pltpu.CompilerParams(
            dimension_semantics=("parallel",),
            vmem_limit_bytes=32 * 1024 * 1024,
        ),
        cost_estimate=pl.CostEstimate(
            flops=flops, transcendentals=0, bytes_accessed=bytes_accessed),
    )(xs, wd, w1, w2, bias, mask)

    out = out_flat.reshape(N, Ho, Wp, C)[:, :, :Wo, :Cout]
    return out


def _fold_bn(gamma, beta, running_mean, running_var, eps=1e-5):
    scale = gamma / jnp.sqrt(running_var + eps)
    bias = beta - running_mean * scale
    return scale.astype(jnp.float32), bias.astype(jnp.float32)


def make_downblock_params(key, in_ch, out_ch):
    """Deterministic parameter init, shapes per the PyTorch module __init__."""
    ks = jax.random.split(key, 6)

    def conv_w(k, cin, cout):  # HWIO
        return (0.1 * jax.random.normal(k, (3, 3, cin, cout))).astype(jnp.float32)

    def bn(k, c):
        k1, k2, k3, k4 = jax.random.split(k, 4)
        gamma = 1.0 + 0.1 * jax.random.normal(k1, (c,))
        beta = 0.1 * jax.random.normal(k2, (c,))
        rmean = 0.1 * jax.random.normal(k3, (c,))
        rvar = jax.random.uniform(k4, (c,), minval=0.5, maxval=1.5)
        return _fold_bn(gamma, beta, rmean, rvar)

    p = {}
    p["w_down"] = conv_w(ks[0], in_ch, out_ch)
    p["s_down"], p["b_down"] = bn(ks[1], out_ch)
    p["w_cv1"] = conv_w(ks[2], out_ch, out_ch)
    p["s_cv1"], p["b_cv1"] = bn(ks[3], out_ch)
    p["w_cv2"] = conv_w(ks[4], out_ch, out_ch)
    p["s_cv2"], p["b_cv2"] = bn(ks[5], out_ch)
    return p


def downblock_forward(x_nchw, p):
    """DownBlock forward.  NCHW in / NCHW out (PyTorch convention); the
    NCHW<->NHWC relayout happens only at this model boundary."""
    x = jnp.transpose(x_nchw, (0, 2, 3, 1))     # -> NHWC
    y = downblock_pallas(x, p)                   # fused 3-conv kernel (bf16 out)
    return jnp.transpose(y, (0, 3, 1, 2)).astype(jnp.float32)


# ------------------------- pure-JAX reference ------------------------------ #
def _ref_conv_bn_relu(x_nhwc, w_hwio, scale, bias, stride):
    # Same quantization points as the kernel: bf16 activations and
    # (scale-folded) bf16 weights, f32 accumulation, f32 bias/ReLU epilogue.
    wq = (w_hwio * scale[None, None, None, :]).astype(jnp.bfloat16)
    y = lax.conv_general_dilated(
        x_nhwc.astype(jnp.bfloat16), wq,
        window_strides=(stride, stride),
        padding=((1, 1), (1, 1)),
        dimension_numbers=("NHWC", "HWIO", "NHWC"),
        preferred_element_type=jnp.float32)
    return jnp.maximum(y + bias[None, None, None, :], 0.0)


def downblock_reference(x_nchw, p):
    x = jnp.transpose(x_nchw, (0, 2, 3, 1))
    x = _ref_conv_bn_relu(x, p["w_down"], p["s_down"], p["b_down"], 2)
    x = _ref_conv_bn_relu(x, p["w_cv1"], p["s_cv1"], p["b_cv1"], 1)
    x = _ref_conv_bn_relu(x, p["w_cv2"], p["s_cv2"], p["b_cv2"], 1)
    x = x.astype(jnp.bfloat16).astype(jnp.float32)   # kernel stores bf16
    return jnp.transpose(x, (0, 3, 1, 2))


# ---------------------------------- main ----------------------------------- #
if __name__ == "__main__":
    key = jax.random.PRNGKey(0)
    k_x, k_p = jax.random.split(key)

    N, in_ch, out_ch, H, W = 2, 4, 8, 16, 16
    x = jax.random.normal(k_x, (N, in_ch, H, W), dtype=jnp.float32)  # NCHW
    params = make_downblock_params(k_p, in_ch, out_ch)

    fwd = jax.jit(downblock_forward)
    out = jax.block_until_ready(fwd(x, params))

    ref = jax.block_until_ready(downblock_reference(x, params))
    assert out.shape == (N, out_ch, H // 2, W // 2), out.shape
    max_err = float(jnp.max(jnp.abs(out - ref)))
    assert jnp.allclose(out, ref, rtol=5e-3, atol=5e-3), max_err

    print("KERNEL_OK")
</pallas_src>

<mosaic_0001>
module attributes {stable_mosaic.version = 11 : i64} {
  func.func @_downblock_kernel(%arg0: i32, %arg1: memref<1x104x128xf32, #tpu.memory_space<vmem>>, %arg2: memref<512x128xbf16, #tpu.memory_space<vmem>>, %arg3: memref<1152x128xbf16, #tpu.memory_space<vmem>>, %arg4: memref<1152x128xbf16, #tpu.memory_space<vmem>>, %arg5: memref<3x128xf32, #tpu.memory_space<vmem>>, %arg6: memref<80x1xf32, #tpu.memory_space<vmem>>, %arg7: memref<1x80x128xbf16, #tpu.memory_space<vmem>>, %arg8: memref<112x128xf32, #tpu.memory_space<vmem>>, %arg9: memref<112x128xf32, #tpu.memory_space<vmem>>) attributes {dimension_semantics = [#tpu.dimension_semantics<parallel>], iteration_bounds = array<i64: 2>, scalar_prefetch = 0 : i64, scratch_operands = 2 : i64, tpu.core_type = #tpu.core_type<tc>, window_params = [{transform_indices = @transform_0, window_bounds = array<i64: 1, 104, 128>}, {pipeline_mode = #tpu.pipeline_mode<synchronous>, transform_indices = @transform_1, window_bounds = array<i64: 512, 128>}, {pipeline_mode = #tpu.pipeline_mode<synchronous>, transform_indices = @transform_2, window_bounds = array<i64: 1152, 128>}, {pipeline_mode = #tpu.pipeline_mode<synchronous>, transform_indices = @transform_3, window_bounds = array<i64: 1152, 128>}, {pipeline_mode = #tpu.pipeline_mode<synchronous>, transform_indices = @transform_4, window_bounds = array<i64: 3, 128>}, {pipeline_mode = #tpu.pipeline_mode<synchronous>, transform_indices = @transform_5, window_bounds = array<i64: 80, 1>}, {transform_indices = @transform_6, window_bounds = array<i64: 1, 80, 128>}]} {
    %c0 = arith.constant 0 : index
    %c0_0 = arith.constant 0 : index
    %0 = vector.load %arg6[%c0, %c0_0] : memref<80x1xf32, #tpu.memory_space<vmem>>, vector<80x1xf32>
    %cst = arith.constant 0.000000e+00 : f32
    %1 = vector.broadcast %cst : f32 to vector<112x128xf32>
    %c0_1 = arith.constant 0 : index
    %c0_2 = arith.constant 0 : index
    %2 = vector.load %arg8[%c0_1, %c0_2] : memref<112x128xf32, #tpu.memory_space<vmem>>, vector<112x128xf32>
    tpu.vector_store %arg8[%c0_1, %c0_2], %1 {strides = array<i32>} : memref<112x128xf32, #tpu.memory_space<vmem>>, vector<112x128xf32>,
    %cst_3 = arith.constant 0.000000e+00 : f32
    %3 = vector.broadcast %cst_3 : f32 to vector<112x128xf32>
    %c0_4 = arith.constant 0 : index
    %c0_5 = arith.constant 0 : index
    %4 = vector.load %arg9[%c0_4, %c0_5] : memref<112x128xf32, #tpu.memory_space<vmem>>, vector<112x128xf32>
    tpu.vector_store %arg9[%c0_4, %c0_5], %3 {strides = array<i32>} : memref<112x128xf32, #tpu.memory_space<vmem>>, vector<112x128xf32>,
    %c0_6 = arith.constant 0 : index
    %c0_7 = arith.constant 0 : index
    %c0_8 = arith.constant 0 : index
    %5 = vector.load %arg1[%c0_6, %c0_7, %c0_8] : memref<1x104x128xf32, #tpu.memory_space<vmem>>, vector<1x80x128xf32>
    %6 = vector.shape_cast %5 : vector<1x80x128xf32> to vector<80x128xf32>
    %c0_9 = arith.constant 0 : index
    %c1 = arith.constant 1 : index
    %c0_10 = arith.constant 0 : index
    %7 = vector.load %arg1[%c0_9, %c1, %c0_10] : memref<1x104x128xf32, #tpu.memory_space<vmem>>, vector<1x80x128xf32>
    %8 = vector.shape_cast %7 : vector<1x80x128xf32> to vector<80x128xf32>
    %c0_11 = arith.constant 0 : index
    %c10 = arith.constant 10 : index
    %c0_12 = arith.constant 0 : index
    %9 = vector.load %arg1[%c0_11, %c10, %c0_12] : memref<1x104x128xf32, #tpu.memory_space<vmem>>, vector<1x80x128xf32>
    %10 = vector.shape_cast %9 : vector<1x80x128xf32> to vector<80x128xf32>
    %c0_13 = arith.constant 0 : index
    %c11 = arith.constant 11 : index
    %c0_14 = arith.constant 0 : index
    %11 = vector.load %arg1[%c0_13, %c11, %c0_14] : memref<1x104x128xf32, #tpu.memory_space<vmem>>, vector<1x80x128xf32>
    %12 = vector.shape_cast %11 : vector<1x80x128xf32> to vector<80x128xf32>
    %13 = tpu.concatenate %6, %8, %10, %12 in 1 : vector<80x128xf32>, vector<80x128xf32>, vector<80x128xf32>, vector<80x128xf32> -> vector<80x512xf32>
    %14 = arith.truncf %13 : vector<80x512xf32> to vector<80x512xbf16>
    %c0_15 = arith.constant 0 : index
    %c0_16 = arith.constant 0 : index
    %15 = vector.load %arg2[%c0_15, %c0_16] : memref<512x128xbf16, #tpu.memory_space<vmem>>, vector<512x128xbf16>
    %cst_17 = arith.constant dense<0.000000e+00> : vector<80x128xf32>
    %16 = tpu.matmul %14, %15, %cst_17 {dimension_numbers = #tpu.dot_dimension_numbers<[1], [0], [0], [1], [0, 0, 1, 1], [], []>} : vector<80x512xbf16>, vector<512x128xbf16>, vector<80x128xf32> -> vector<80x128xf32>
    %c0_18 = arith.constant 0 : index
    %c0_19 = arith.constant 0 : index
    %17 = vector.load %arg5[%c0_18, %c0_19] : memref<3x128xf32, #tpu.memory_space<vmem>>, vector<1x128xf32>
    %18 = vector.broadcast %17 : vector<1x128xf32> to vector<80x128xf32>
    %19 = arith.addf %16, %18 : vector<80x128xf32>
    %cst_20 = arith.constant 0.000000e+00 : f32
    %20 = vector.broadcast %cst_20 : f32 to vector<80x128xf32>
    %21 = arith.maximumf %19, %20 : vector<80x128xf32>
    %22 = vector.broadcast %0 : vector<80x1xf32> to vector<80x128xf32>
    %23 = arith.mulf %21, %22 : vector<80x128xf32>
    %c11_21 = arith.constant 11 : index
    %c0_22 = arith.constant 0 : index
    %24 = vector.load %arg8[%c11_21, %c0_22] : memref<112x128xf32, #tpu.memory_space<vmem>>, vector<80x128xf32>
    tpu.vector_store %arg8[%c11_21, %c0_22], %23 {strides = array<i32>} : memref<112x128xf32, #tpu.memory_space<vmem>>, vector<80x128xf32>,
    %c0_23 = arith.constant 0 : index
    %c0_24 = arith.constant 0 : index
    %25 = vector.load %arg8[%c0_23, %c0_24] : memref<112x128xf32, #tpu.memory_space<vmem>>, vector<80x128xf32>
    %c1_25 = arith.constant 1 : index
    %c0_26 = arith.constant 0 : index
    %26 = vector.load %arg8[%c1_25, %c0_26] : memref<112x128xf32, #tpu.memory_space<vmem>>, vector<80x128xf32>
    %c2 = arith.constant 2 : index
    %c0_27 = arith.constant 0 : index
    %27 = vector.load %arg8[%c2, %c0_27] : memref<112x128xf32, #tpu.memory_space<vmem>>, vector<80x128xf32>
    %c10_28 = arith.constant 10 : index
    %c0_29 = arith.constant 0 : index
    %28 = vector.load %arg8[%c10_28, %c0_29] : memref<112x128xf32, #tpu.memory_space<vmem>>, vector<80x128xf32>
    %c11_30 = arith.constant 11 : index
    %c0_31 = arith.constant 0 : index
    %29 = vector.load %arg8[%c11_30, %c0_31] : memref<112x128xf32, #tpu.memory_space<vmem>>, vector<80x128xf32>
    %c12 = arith.constant 12 : index
    %c0_32 = arith.constant 0 : index
    %30 = vector.load %arg8[%c12, %c0_32] : memref<112x128xf32, #tpu.memory_space<vmem>>, vector<80x128xf32>
    %c20 = arith.constant 20 : index
    %c0_33 = arith.constant 0 : index
    %31 = vector.load %arg8[%c20, %c0_33] : memref<112x128xf32, #tpu.memory_space<vmem>>, vector<80x128xf32>
    %c21 = arith.constant 21 : index
    %c0_34 = arith.constant 0 : index
    %32 = vector.load %arg8[%c21, %c0_34] : memref<112x128xf32, #tpu.memory_space<vmem>>, vector<80x128xf32>
    %c22 = arith.constant 22 : index
    %c0_35 = arith.constant 0 : index
    %33 = vector.load %arg8[%c22, %c0_35] : memref<112x128xf32, #tpu.memory_space<vmem>>, vector<80x128xf32>
    %34 = tpu.concatenate %25, %26, %27, %28, %29, %30, %31, %32, %33 in 1 : vector<80x128xf32>, vector<80x128xf32>, vector<80x128xf32>, vector<80x128xf32>, vector<80x128xf32>, vector<80x128xf32>, vector<80x128xf32>, vector<80x128xf32>, vector<80x128xf32> -> vector<80x1152xf32>
    %35 = arith.truncf %34 : vector<80x1152xf32> to vector<80x1152xbf16>
    %c0_36 = arith.constant 0 : index
    %c0_37 = arith.constant 0 : index
    %36 = vector.load %arg3[%c0_36, %c0_37] : memref<1152x128xbf16, #tpu.memory_space<vmem>>, vector<1152x128xbf16>
    %cst_38 = arith.constant dense<0.000000e+00> : vector<80x128xf32>
    %37 = tpu.matmul %35, %36, %cst_38 {dimension_numbers = #tpu.dot_dimension_numbers<[1], [0], [0], [1], [0, 0, 1, 1], [], []>} : vector<80x1152xbf16>, vector<1152x128xbf16>, vector<80x128xf32> -> vector<80x128xf32>
    %c1_39 = arith.constant 1 : index
    %c0_40 = arith.constant 0 : index
    %38 = vector.load %arg5[%c1_39, %c0_40] : memref<3x128xf32, #tpu.memory_space<vmem>>, vector<1x128xf32>
    %39 = vector.broadcast %38 : vector<1x128xf32> to vector<80x128xf32>
    %40 = arith.addf %37, %39 : vector<80x128xf32>
    %cst_41 = arith.constant 0.000000e+00 : f32
    %41 = vector.broadcast %cst_41 : f32 to vector<80x128xf32>
    %42 = arith.maximumf %40, %41 : vector<80x128xf32>
    %43 = vector.broadcast %0 : vector<80x1xf32> to vector<80x128xf32>
    %44 = arith.mulf %42, %43 : vector<80x128xf32>
    %c11_42 = arith.constant 11 : index
    %c0_43 = arith.constant 0 : index
    %45 = vector.load %arg9[%c11_42, %c0_43] : memref<112x128xf32, #tpu.memory_space<vmem>>, vector<80x128xf32>
    tpu.vector_store %arg9[%c11_42, %c0_43], %44 {strides = array<i32>} : memref<112x128xf32, #tpu.memory_space<vmem>>, vector<80x128xf32>,
    %c0_44 = arith.constant 0 : index
    %c0_45 = arith.constant 0 : index
    %46 = vector.load %arg9[%c0_44, %c0_45] : memref<112x128xf32, #tpu.memory_space<vmem>>, vector<80x128xf32>
    %c1_46 = arith.constant 1 : index
    %c0_47 = arith.constant 0 : index
    %47 = vector.load %arg9[%c1_46, %c0_47] : memref<112x128xf32, #tpu.memory_space<vmem>>, vector<80x128xf32>
    %c2_48 = arith.constant 2 : index
    %c0_49 = arith.constant 0 : index
    %48 = vector.load %arg9[%c2_48, %c0_49] : memref<112x128xf32, #tpu.memory_space<vmem>>, vector<80x128xf32>
    %c10_50 = arith.constant 10 : index
    %c0_51 = arith.constant 0 : index
    %49 = vector.load %arg9[%c10_50, %c0_51] : memref<112x128xf32, #tpu.memory_space<vmem>>, vector<80x128xf32>
    %c11_52 = arith.constant 11 : index
    %c0_53 = arith.constant 0 : index
    %50 = vector.load %arg9[%c11_52, %c0_53] : memref<112x128xf32, #tpu.memory_space<vmem>>, vector<80x128xf32>
    %c12_54 = arith.constant 12 : index
    %c0_55 = arith.constant 0 : index
    %51 = vector.load %arg9[%c12_54, %c0_55] : memref<112x128xf32, #tpu.memory_space<vmem>>, vector<80x128xf32>
    %c20_56 = arith.constant 20 : index
    %c0_57 = arith.constant 0 : index
    %52 = vector.load %arg9[%c20_56, %c0_57] : memref<112x128xf32, #tpu.memory_space<vmem>>, vector<80x128xf32>
    %c21_58 = arith.constant 21 : index
    %c0_59 = arith.constant 0 : index
    %53 = vector.load %arg9[%c21_58, %c0_59] : memref<112x128xf32, #tpu.memory_space<vmem>>, vector<80x128xf32>
    %c22_60 = arith.constant 22 : index
    %c0_61 = arith.constant 0 : index
    %54 = vector.load %arg9[%c22_60, %c0_61] : memref<112x128xf32, #tpu.memory_space<vmem>>, vector<80x128xf32>
    %55 = tpu.concatenate %46, %47, %48, %49, %50, %51, %52, %53, %54 in 1 : vector<80x128xf32>, vector<80x128xf32>, vector<80x128xf32>, vector<80x128xf32>, vector<80x128xf32>, vector<80x128xf32>, vector<80x128xf32>, vector<80x128xf32>, vector<80x128xf32> -> vector<80x1152xf32>
    %56 = arith.truncf %55 : vector<80x1152xf32> to vector<80x1152xbf16>
    %c0_62 = arith.constant 0 : index
    %c0_63 = arith.constant 0 : index
    %57 = vector.load %arg4[%c0_62, %c0_63] : memref<1152x128xbf16, #tpu.memory_space<vmem>>, vector<1152x128xbf16>
    %cst_64 = arith.constant dense<0.000000e+00> : vector<80x128xf32>
    %58 = tpu.matmul %56, %57, %cst_64 {dimension_numbers = #tpu.dot_dimension_numbers<[1], [0], [0], [1], [0, 0, 1, 1], [], []>} : vector<80x1152xbf16>, vector<1152x128xbf16>, vector<80x128xf32> -> vector<80x128xf32>
    %c2_65 = arith.constant 2 : index
    %c0_66 = arith.constant 0 : index
    %59 = vector.load %arg5[%c2_65, %c0_66] : memref<3x128xf32, #tpu.memory_space<vmem>>, vector<1x128xf32>
    %60 = vector.broadcast %59 : vector<1x128xf32> to vector<80x128xf32>
    %61 = arith.addf %58, %60 : vector<80x128xf32>
    %cst_67 = arith.constant 0.000000e+00 : f32
    %62 = vector.broadcast %cst_67 : f32 to vector<80x128xf32>
    %63 = arith.maximumf %61, %62 : vector<80x128xf32>
    %64 = arith.truncf %63 : vector<80x128xf32> to vector<80x128xbf16>
    %c0_68 = arith.constant 0 : index
    %c0_69 = arith.constant 0 : index
    %c0_70 = arith.constant 0 : index
    %65 = vector.load %arg7[%c0_68, %c0_69, %c0_70] : memref<1x80x128xbf16, #tpu.memory_space<vmem>>, vector<1x80x128xbf16>
    %66 = vector.shape_cast %65 : vector<1x80x128xbf16> to vector<80x128xbf16>
    %67 = vector.shape_cast %64 : vector<80x128xbf16> to vector<1x80x128xbf16>
    tpu.vector_store %arg7[%c0_68, %c0_69, %c0_70], %67 {strides = array<i32>} : memref<1x80x128xbf16, #tpu.memory_space<vmem>>, vector<1x80x128xbf16>,
    return
  }
  func.func @transform_0(%arg0: i32) -> (i32, i32, i32) {
    %c0_i32 = arith.constant 0 : i32
    %c0_i32_0 = arith.constant 0 : i32
    %c0_i32_1 = arith.constant 0 : i32
    return %arg0, %c0_i32, %c0_i32_0 : i32, i32, i32
  }
  func.func @transform_1(%arg0: i32) -> (i32, i32) {
    %c0_i32 = arith.constant 0 : i32
    %c0_i32_0 = arith.constant 0 : i32
    %c0_i32_1 = arith.constant 0 : i32
    return %c0_i32, %c0_i32_0 : i32, i32
  }
  func.func @transform_2(%arg0: i32) -> (i32, i32) {
    %c0_i32 = arith.constant 0 : i32
    %c0_i32_0 = arith.constant 0 : i32
    %c0_i32_1 = arith.constant 0 : i32
    return %c0_i32, %c0_i32_0 : i32, i32
  }
  func.func @transform_3(%arg0: i32) -> (i32, i32) {
    %c0_i32 = arith.constant 0 : i32
    %c0_i32_0 = arith.constant 0 : i32
    %c0_i32_1 = arith.constant 0 : i32
    return %c0_i32, %c0_i32_0 : i32, i32
  }
  func.func @transform_4(%arg0: i32) -> (i32, i32) {
    %c0_i32 = arith.constant 0 : i32
    %c0_i32_0 = arith.constant 0 : i32
    %c0_i32_1 = arith.constant 0 : i32
    return %c0_i32, %c0_i32_0 : i32, i32
  }
  func.func @transform_5(%arg0: i32) -> (i32, i32) {
    %c0_i32 = arith.constant 0 : i32
    %c0_i32_0 = arith.constant 0 : i32
    %c0_i32_1 = arith.constant 0 : i32
    return %c0_i32, %c0_i32_0 : i32, i32
  }
  func.func @transform_6(%arg0: i32) -> (i32, i32, i32) {
    %c0_i32 = arith.constant 0 : i32
    %c0_i32_0 = arith.constant 0 : i32
    %c0_i32_1 = arith.constant 0 : i32
    return %arg0, %c0_i32, %c0_i32_0 : i32, i32, i32
  }
}

</mosaic_0001>

<llo_original>
// kernel: downblock_forward.1
$region0: #{downblock_forward.1}
  #allocation0 [shape = 'u32[]', space=smem, size = 0x4, offset = 0x4, fixed_abs, tag = 'smem constant byte address 0x4 - core index']
  #allocation1 [shape = 'u32[72,128]{1,0:T(1,128)}', space=vmem, size = 0x9000, scoped, tag = 'internal scratch']
  #allocation2 [shape = 'f32[112,128]{1,0:T(8,128)}', space=vmem, size = 0xe000, scoped, tag = 'scratch operand']
  #allocation3 [shape = 'f32[112,128]{1,0:T(8,128)}', space=vmem, size = 0xe000, scoped, tag = 'scratch operand']
  %s0 = inlined_call_operand.vmem [shape: f32[2,104,128], index: 0, kind: input, shape index: {}]
  %s1 = inlined_call_operand.vmem [shape: bf16[512,128], index: 1, kind: input, shape index: {}]
  %s2 = inlined_call_operand.vmem [shape: bf16[1152,128], index: 2, kind: input, shape index: {}]
  %s3 = inlined_call_operand.vmem [shape: bf16[1152,128], index: 3, kind: input, shape index: {}]
  %s4 = inlined_call_operand.vmem [shape: f32[3,128], index: 4, kind: input, shape index: {}]
  %s5 = inlined_call_operand.vmem [shape: f32[80,1], index: 5, kind: input, shape index: {}]
  %s6 = inlined_call_operand.vmem [shape: bf16[2,80,128], index: 6, kind: output, shape index: {}]
  %s7 = sld [smem:[#allocation0]]
  $region57: #{downblock_forward.1} parent=0
    _
  %s9 = ssub.s32 1, %s7
  %s10 = scalar_select 0, %s9, %s7
  loop: start=0, step=1, limit=4
  $region2: #{downblock_forward.1} parent=0 // loop_pre_header
    _
  $region3: #{downblock_forward.1} parent=0 // loop_header
    %s12 = sphi 0, %s16
    %p13 = scmp.ge.s32.totalorder %s12, 4
    %s22 = sphi 0, %s24
    %s25 = sphi 0, %s22
    %s26 = sphi 0, %s25
    %s42 = sphi 0, %s26
    %s46 = sphi 0, %s46
    %s48 = sphi 0, %s46
    %s49 = sphi 0, %s48
    %s63 = sphi 0, %s49
    %s67 = sphi 0, %s67
    %s69 = sphi 0, %s67
    %s70 = sphi 0, %s69
    %s84 = sphi 0, %s70
    %s88 = sphi 0, %s88
    %s90 = sphi 0, %s88
    %s91 = sphi 0, %s90
    %s105 = sphi 0, %s91
    %s109 = sphi 0, %s109
    %s111 = sphi 0, %s109
    %s112 = sphi 0, %s111
    %s126 = sphi 0, %s112
    %s130 = sphi 0, %s130
    %s132 = sphi 0, %s130
    %s133 = sphi 0, %s132
    %s147 = sphi 0, %s133
    %s153 = sphi 0, %s155
    %s156 = sphi 0, %s153
    %s157 = sphi 0, %s156
    %s173 = sphi 0, %s157
  $region4: #{downblock_forward.1} parent=0 // loop_header_branch
    %15 = sbr.rel (%p13) target = $region8
  $region5: #{downblock_forward.1} parent=0 // loop_body
    %s17 = ssub.s32 %s12, 1
    %s18 = ssub.s32 %s12, 2
    %s19 = sadd.s32 %s12, 1
    %s20 = ssub.s32 %s12, %s19
    %p21 = scmp.eq.s32.totalorder %s20, 0
    %s23 = sadd.s32 %s22, 1
    %s24 = scalar_select %p21, %s22, %s23
    %p27 = pneg %p21
    %p28 = scmp.eq.s32.totalorder %s12, 1
    %p29 = por %p27, %p28
    %p30 = scmp.ne.s32.totalorder %s22, %s25
    %p31 = scmp.eq.s32.totalorder %s12, 0
    %p32 = por %p30, %p31
    %p33 = scmp.ne.s32.totalorder %s22, %s25
    %p34 = scmp.eq.s32.totalorder %s17, 1
    %p35 = por %p33, %p34
    %p36 = scmp.ne.s32.totalorder %s25, %s26
    %p37 = scmp.eq.s32.totalorder %s17, 0
    %p38 = por %p36, %p37
    %p39 = scmp.ne.s32.totalorder %s25, %s26
    %p40 = scmp.eq.s32.totalorder %s18, 1
    %p41 = por %p39, %p40
    %p43 = scmp.ne.s32.totalorder %s26, %s42
    %p44 = scmp.eq.s32.totalorder %s18, 0
    %p45 = por %p43, %p44
    %s47 = sadd.s32 %s46, 1
    %p50 = scmp.eq.s32.totalorder %s12, 1
    %p51 = scmp.ne.s32.totalorder %s46, %s48
    %p52 = scmp.eq.s32.totalorder %s12, 0
    %p53 = por %p51, %p52
    %p54 = scmp.ne.s32.totalorder %s46, %s48
    %p55 = scmp.eq.s32.totalorder %s17, 1
    %p56 = por %p54, %p55
    %p57 = scmp.ne.s32.totalorder %s48, %s49
    %p58 = scmp.eq.s32.totalorder %s17, 0
    %p59 = por %p57, %p58
    %p60 = scmp.ne.s32.totalorder %s48, %s49
    %p61 = scmp.eq.s32.totalorder %s18, 1
    %p62 = por %p60, %p61
    %p64 = scmp.ne.s32.totalorder %s49, %s63
    %p65 = scmp.eq.s32.totalorder %s18, 0
    %p66 = por %p64, %p65
    %s68 = sadd.s32 %s67, 1
    %p71 = scmp.eq.s32.totalorder %s12, 1
    %p72 = scmp.ne.s32.totalorder %s67, %s69
    %p73 = scmp.eq.s32.totalorder %s12, 0
    %p74 = por %p72, %p73
    %p75 = scmp.ne.s32.totalorder %s67, %s69
    %p76 = scmp.eq.s32.totalorder %s17, 1
    %p77 = por %p75, %p76
    %p78 = scmp.ne.s32.totalorder %s69, %s70
    %p79 = scmp.eq.s32.totalorder %s17, 0
    %p80 = por %p78, %p79
    %p81 = scmp.ne.s32.totalorder %s69, %s70
    %p82 = scmp.eq.s32.totalorder %s18, 1
    %p83 = por %p81, %p82
    %p85 = scmp.ne.s32.totalorder %s70, %s84
    %p86 = scmp.eq.s32.totalorder %s18, 0
    %p87 = por %p85, %p86
    %s89 = sadd.s32 %s88, 1
    %p92 = scmp.eq.s32.totalorder %s12, 1
    %p93 = scmp.ne.s32.totalorder %s88, %s90
    %p94 = scmp.eq.s32.totalorder %s12, 0
    %p95 = por %p93, %p94
    %p96 = scmp.ne.s32.totalorder %s88, %s90
    %p97 = scmp.eq.s32.totalorder %s17, 1
    %p98 = por %p96, %p97
    %p99 = scmp.ne.s32.totalorder %s90, %s91
    %p100 = scmp.eq.s32.totalorder %s17, 0
    %p101 = por %p99, %p100
    %p102 = scmp.ne.s32.totalorder %s90, %s91
    %p103 = scmp.eq.s32.totalorder %s18, 1
    %p104 = por %p102, %p103
    %p106 = scmp.ne.s32.totalorder %s91, %s105
    %p107 = scmp.eq.s32.totalorder %s18, 0
    %p108 = por %p106, %p107
    %s110 = sadd.s32 %s109, 1
    %p113 = scmp.eq.s32.totalorder %s12, 1
    %p114 = scmp.ne.s32.totalorder %s109, %s111
    %p115 = scmp.eq.s32.totalorder %s12, 0
    %p116 = por %p114, %p115
    %p117 = scmp.ne.s32.totalorder %s109, %s111
    %p118 = scmp.eq.s32.totalorder %s17, 1
    %p119 = por %p117, %p118
    %p120 = scmp.ne.s32.totalorder %s111, %s112
    %p121 = scmp.eq.s32.totalorder %s17, 0
    %p122 = por %p120, %p121
    %p123 = scmp.ne.s32.totalorder %s111, %s112
    %p124 = scmp.eq.s32.totalorder %s18, 1
    %p125 = por %p123, %p124
    %p127 = scmp.ne.s32.totalorder %s112, %s126
    %p128 = scmp.eq.s32.totalorder %s18, 0
    %p129 = por %p127, %p128
    %s131 = sadd.s32 %s130, 1
    %p134 = scmp.eq.s32.totalorder %s12, 1
    %p135 = scmp.ne.s32.totalorder %s130, %s132
    %p136 = scmp.eq.s32.totalorder %s12, 0
    %p137 = por %p135, %p136
    %p138 = scmp.ne.s32.totalorder %s130, %s132
    %p139 = scmp.eq.s32.totalorder %s17, 1
    %p140 = por %p138, %p139
    %p141 = scmp.ne.s32.totalorder %s132, %s133
    %p142 = scmp.eq.s32.totalorder %s17, 0
    %p143 = por %p141, %p142
    %p144 = scmp.ne.s32.totalorder %s132, %s133
    %p145 = scmp.eq.s32.totalorder %s18, 1
    %p146 = por %p144, %p145
    %p148 = scmp.ne.s32.totalorder %s133, %s147
    %p149 = scmp.eq.s32.totalorder %s18, 0
    %p150 = por %p148, %p149
    %s151 = ssub.s32 %s12, %s19
    %p152 = scmp.eq.s32.totalorder %s151, 0
    %s154 = sadd.s32 %s153, 1
    %s155 = scalar_select %p152, %s153, %s154
    %p158 = pneg %p152
    %p159 = scmp.eq.s32.totalorder %s12, 1
    %p160 = por %p158, %p159
    %p161 = scmp.ne.s32.totalorder %s153, %s156
    %p162 = scmp.eq.s32.totalorder %s12, 0
    %p163 = por %p161, %p162
    %p164 = scmp.ne.s32.totalorder %s153, %s156
    %p165 = scmp.eq.s32.totalorder %s17, 1
    %p166 = por %p164, %p165
    %p167 = scmp.ne.s32.totalorder %s156, %s157
    %p168 = scmp.eq.s32.totalorder %s17, 0
    %p169 = por %p167, %p168
    %p170 = scmp.ne.s32.totalorder %s156, %s157
    %p171 = scmp.eq.s32.totalorder %s18, 1
    %p172 = por %p170, %p171
    %p174 = scmp.ne.s32.totalorder %s157, %s173
    %p175 = scmp.eq.s32.totalorder %s18, 0
    %p176 = por %p174, %p175
    %p177 = scmp.le.s32.totalorder 1, %s12
    %p178 = scmp.lt.s32.totalorder %s12, 3
    %p179 = pnand %p177, %p178
    %p180 = pneg %p179
    // Predicated region
    $region9: #{downblock_forward.1} parent=5 // pred_check
      _
    $region10: #{downblock_forward.1} parent=5 // pred_check_branch
      %182 = sbr.rel (%p179) target = $region12
    $region11: #{downblock_forward.1} parent=5 // pred_region
      %s183 = ssub.s32 %s12, 1
      // Predicated region
      $region13: #{downblock_forward.1} parent=11 // pred_check
        %p184 = pneg %p59
      $region14: #{downblock_forward.1} parent=11 // pred_check_branch
        %186 = sbr.rel (%p184) target = $region16
      $region15: #{downblock_forward.1} parent=11 // pred_region
        _
      $region16: #{downblock_forward.1} parent=11 // pred_fallthru
        _
      // Predicated region
      $region17: #{downblock_forward.1} parent=11 // pred_check
        %p187 = pneg %p80
      $region18: #{downblock_forward.1} parent=11 // pred_check_branch
        %189 = sbr.rel (%p187) target = $region20
      $region19: #{downblock_forward.1} parent=11 // pred_region
        _
      $region20: #{downblock_forward.1} parent=11 // pred_fallthru
        _
      // Predicated region
      $region21: #{downblock_forward.1} parent=11 // pred_check
        %p190 = pneg %p101
      $region22: #{downblock_forward.1} parent=11 // pred_check_branch
        %192 = sbr.rel (%p190) target = $region24
      $region23: #{downblock_forward.1} parent=11 // pred_region
        _
      $region24: #{downblock_forward.1} parent=11 // pred_fallthru
        _
      // Predicated region
      $region25: #{downblock_forward.1} parent=11 // pred_check
        %p193 = pneg %p122
      $region26: #{downblock_forward.1} parent=11 // pred_check_branch
        %195 = sbr.rel (%p193) target = $region28
      $region27: #{downblock_forward.1} parent=11 // pred_region
        _
      $region28: #{downblock_forward.1} parent=11 // pred_fallthru
        _
      // Predicated region
      $region29: #{downblock_forward.1} parent=11 // pred_check
        %p196 = pneg %p143
      $region30: #{downblock_forward.1} parent=11 // pred_check_branch
        %198 = sbr.rel (%p196) target = $region32
      $region31: #{downblock_forward.1} parent=11 // pred_region
        _
      $region32: #{downblock_forward.1} parent=11 // pred_fallthru
        _
    $region12: #{downblock_forward.1} parent=5 // pred_fallthru
      _
    %p199 = scmp.lt.s32.totalorder %s12, 2
    // Predicated region
    $region33: #{downblock_forward.1} parent=5 // pred_check
      %p200 = pneg %p199
    $region34: #{downblock_forward.1} parent=5 // pred_check_branch
      %202 = sbr.rel (%p200) target = $region36
    $region35: #{downblock_forward.1} parent=5 // pred_region
      // Predicated region
      $region37: #{downblock_forward.1} parent=35 // pred_check
        %p203 = pneg %p32
      $region38: #{downblock_forward.1} parent=35 // pred_check_branch
        %205 = sbr.rel (%p203) target = $region40
      $region39: #{downblock_forward.1} parent=35 // pred_region
        %p206 = scmp.lt.s32.totalorder %s12, 1
        %s207 = scalar_select %p206, %s12, 1
        %s208 = smul.addr %s207, 13
        %s209 = smul.addr %s208, 8
        %s210 = scalar_lea.vmem %s0, %s209
      $region40: #{downblock_forward.1} parent=35 // pred_fallthru
        _
    $region36: #{downblock_forward.1} parent=5 // pred_fallthru
      _
    %p211 = scmp.le.s32.totalorder 1, %s12
    %p212 = scmp.lt.s32.totalorder %s12, 3
    %p213 = pnand %p211, %p212
    %p214 = pneg %p213
    // Predicated region
    $region41: #{downblock_forward.1} parent=5 // pred_check
      _
    $region42: #{downblock_forward.1} parent=5 // pred_check_branch
      %216 = sbr.rel (%p213) target = $region44
    $region43: #{downblock_forward.1} parent=5 // pred_region
      %s217 = ssub.s32 %s12, 1
      %p218 = scmp.lt.s32.totalorder %s17, 1
      %s219 = scalar_select %p218, %s17, 1
      %s220 = smul.addr %s219, 13
      %s221 = smul.addr %s220, 8
      %s222 = scalar_lea.vmem %s0, %s221
      %p223 = pneg %p38
      %p224 = pneg %p35
      %p225 = pneg %p59
      %p226 = pneg %p56
      %p227 = pneg %p80
      %p228 = pneg %p77
      %p229 = pneg %p101
      %p230 = pneg %p98
      %p231 = pneg %p122
      %p232 = pneg %p119
      %p233 = pneg %p143
      %p234 = pneg %p140
      %p235 = pneg %p169
      %p236 = pneg %p166
      %p237 = scmp.lt.s32.totalorder %s17, 1
      %s238 = scalar_select %p237, %s17, 1
      %s239 = smul.addr %s238, 10
      %s240 = smul.addr %s239, 4
      %s241 = scalar_lea.vmem %s6, %s240
      %p242 = scmp.lt.s32.totalorder %s17, 1
      %s243 = scalar_select %p242, %s17, 1
      %s244 = smul.addr %s243, 13
      %s245 = smul.addr %s244, 8
      %s246 = scalar_lea.vmem %s0, %s245
      %p247 = scmp.lt.s32.totalorder %s17, 1
      %s248 = scalar_select %p247, %s17, 1
      %s249 = smul.addr %s248, 10
      %s250 = smul.addr %s249, 4
      %s251 = scalar_lea.vmem %s6, %s250
      %v252 = vld [vmem:[%s5] sm:$0xff]
      %v253 = vld [vmem:[%s5 + $0x8] sm:$0xff]
      %v254 = vld [vmem:[%s5 + $0x10] sm:$0xff]
      %v255 = vld [vmem:[%s5 + $0x18] sm:$0xff]
      %v256 = vld [vmem:[%s5 + $0x20] sm:$0xff]
      %v257 = vld [vmem:[%s5 + $0x28] sm:$0xff]
      %v258 = vld [vmem:[%s5 + $0x30] sm:$0xff]
      %v259 = vld [vmem:[%s5 + $0x38] sm:$0xff]
      %v260 = vld [vmem:[%s5 + $0x40] sm:$0xff]
      %v261 = vld [vmem:[%s5 + $0x48] sm:$0xff]
      %262 = vst [vmem:[#allocation2] sm:$0xff] 0.0
      %263 = vst [vmem:[#allocation2 + $0x8] sm:$0xff] 0.0
      %264 = vst [vmem:[#allocation2 + $0x10] sm:$0xff] 0.0
      %265 = vst [vmem:[#allocation2 + $0x18] sm:$0xff] 0.0
      %266 = vst [vmem:[#allocation2 + $0x20] sm:$0xff] 0.0
      %267 = vst [vmem:[#allocation2 + $0x28] sm:$0xff] 0.0
      %268 = vst [vmem:[#allocation2 + $0x30] sm:$0xff] 0.0
      %269 = vst [vmem:[#allocation2 + $0x38] sm:$0xff] 0.0
      %270 = vst [vmem:[#allocation2 + $0x40] sm:$0xff] 0.0
      %271 = vst [vmem:[#allocation2 + $0x48] sm:$0xff] 0.0
      %272 = vst [vmem:[#allocation2 + $0x50] sm:$0xff] 0.0
      %273 = vst [vmem:[#allocation2 + $0x58] sm:$0xff] 0.0
      %274 = vst [vmem:[#allocation2 + $0x60] sm:$0xff] 0.0
      %275 = vst [vmem:[#allocation2 + $0x68] sm:$0xff] 0.0
      %276 = vst [vmem:[#allocation3] sm:$0xff] 0.0
      %277 = vst [vmem:[#allocation3 + $0x8] sm:$0xff] 0.0
      %278 = vst [vmem:[#allocation3 + $0x10] sm:$0xff] 0.0
      %279 = vst [vmem:[#allocation3 + $0x18] sm:$0xff] 0.0
      %280 = vst [vmem:[#allocation3 + $0x20] sm:$0xff] 0.0
      %281 = vst [vmem:[#allocation3 + $0x28] sm:$0xff] 0.0
      %282 = vst [vmem:[#allocation3 + $0x30] sm:$0xff] 0.0
      %283 = vst [vmem:[#allocation3 + $0x38] sm:$0xff] 0.0
      %284 = vst [vmem:[#allocation3 + $0x40] sm:$0xff] 0.0
      %285 = vst [vmem:[#allocation3 + $0x48] sm:$0xff] 0.0
      %286 = vst [vmem:[#allocation3 + $0x50] sm:$0xff] 0.0
      %287 = vst [vmem:[#allocation3 + $0x58] sm:$0xff] 0.0
      %288 = vst [vmem:[#allocation3 + $0x60] sm:$0xff] 0.0
      %289 = vst [vmem:[#allocation3 + $0x68] sm:$0xff] 0.0
      %v290 = vld [vmem:[%s246] sm:$0xff]
      %v291 = vld [vmem:[%s246 + $0x8] sm:$0xff]
      %v292 = vld [vmem:[%s246 + $0x10] sm:$0xff]
      %v293 = vld [vmem:[%s246 + $0x18] sm:$0xff]
      %v294 = vld [vmem:[%s246 + $0x20] sm:$0xff]
      %v295 = vld [vmem:[%s246 + $0x28] sm:$0xff]
      %v296 = vld [vmem:[%s246 + $0x30] sm:$0xff]
      %v297 = vld [vmem:[%s246 + $0x38] sm:$0xff]
      %v298 = vld [vmem:[%s246 + $0x40] sm:$0xff]
      %v299 = vld [vmem:[%s246 + $0x48] sm:$0xff]
      %v300 = vld [vmem:[%s246 + $0x1] sm:$0xff]
      %v301 = vld [vmem:[%s246 + $0x9] sm:$0xff]
      %v302 = vld [vmem:[%s246 + $0x11] sm:$0xff]
      %v303 = vld [vmem:[%s246 + $0x19] sm:$0xff]
      %v304 = vld [vmem:[%s246 + $0x21] sm:$0xff]
      %v305 = vld [vmem:[%s246 + $0x29] sm:$0xff]
      %v306 = vld [vmem:[%s246 + $0x31] sm:$0xff]
      %v307 = vld [vmem:[%s246 + $0x39] sm:$0xff]
      %v308 = vld [vmem:[%s246 + $0x41] sm:$0xff]
      %v309 = vld [vmem:[%s246 + $0x49] sm:$0xff]
      %v310 = vld [vmem:[%s246 + $0xa] sm:$0xff]
      %v311 = vld [vmem:[%s246 + $0x12] sm:$0xff]
      %v312 = vld [vmem:[%s246 + $0x1a] sm:$0xff]
      %v313 = vld [vmem:[%s246 + $0x22] sm:$0xff]
      %v314 = vld [vmem:[%s246 + $0x2a] sm:$0xff]
      %v315 = vld [vmem:[%s246 + $0x32] sm:$0xff]
      %v316 = vld [vmem:[%s246 + $0x3a] sm:$0xff]
      %v317 = vld [vmem:[%s246 + $0x42] sm:$0xff]
      %v318 = vld [vmem:[%s246 + $0x4a] sm:$0xff]
      %v319 = vld [vmem:[%s246 + $0x52] sm:$0xff]
      %v320 = vld [vmem:[%s246 + $0xb] sm:$0xff]
      %v321 = vld [vmem:[%s246 + $0x13] sm:$0xff]
      %v322 = vld [vmem:[%s246 + $0x1b] sm:$0xff]
      %v323 = vld [vmem:[%s246 + $0x23] sm:$0xff]
      %v324 = vld [vmem:[%s246 + $0x2b] sm:$0xff]
      %v325 = vld [vmem:[%s246 + $0x33] sm:$0xff]
      %v326 = vld [vmem:[%s246 + $0x3b] sm:$0xff]
      %v327 = vld [vmem:[%s246 + $0x43] sm:$0xff]
      %v328 = vld [vmem:[%s246 + $0x4b] sm:$0xff]
      %v329 = vld [vmem:[%s246 + $0x53] sm:$0xff]
      %v330 = vpack.c.bf16 %v291, %v290
      %v331 = vpack.c.bf16 %v301, %v300
      %v332 = vpack.c.bf16 %v311, %v310
      %v333 = vpack.c.bf16 %v321, %v320
      %v334 = vpack.c.bf16 %v293, %v292
      %v335 = vpack.c.bf16 %v303, %v302
      %v336 = vpack.c.bf16 %v313, %v312
      %v337 = vpack.c.bf16 %v323, %v322
      %v338 = vpack.c.bf16 %v295, %v294
      %v339 = vpack.c.bf16 %v305, %v304
      %v340 = vpack.c.bf16 %v315, %v314
      %v341 = vpack.c.bf16 %v325, %v324
      %v342 = vpack.c.bf16 %v297, %v296
      %v343 = vpack.c.bf16 %v307, %v306
      %v344 = vpack.c.bf16 %v317, %v316
      %v345 = vpack.c.bf16 %v327, %v326
      %v346 = vpack.c.bf16 %v299, %v298
      %v347 = vpack.c.bf16 %v309, %v308
      %v348 = vpack.c.bf16 %v319, %v318
      %v349 = vpack.c.bf16 %v329, %v328
      %v350 = vld [vmem:[%s1] sm:$0xf]
      %v351 = vld [vmem:[%s1 + $0x4] sm:$0xf]
      %v352 = vld [vmem:[%s1 + $0x8] sm:$0xf]
      %v353 = vld [vmem:[%s1 + $0xc] sm:$0xf]
      %v354 = vld [vmem:[%s1 + $0x10] sm:$0xf]
      %v355 = vld [vmem:[%s1 + $0x14] sm:$0xf]
      %v356 = vld [vmem:[%s1 + $0x18] sm:$0xf]
      %v357 = vld [vmem:[%s1 + $0x1c] sm:$0xf]
      %v358 = vld [vmem:[%s1 + $0x20] sm:$0xf]
      %v359 = vld [vmem:[%s1 + $0x24] sm:$0xf]
      %v360 = vld [vmem:[%s1 + $0x28] sm:$0xf]
      %v361 = vld [vmem:[%s1 + $0x2c] sm:$0xf]
      %v362 = vld [vmem:[%s1 + $0x30] sm:$0xf]
      %v363 = vld [vmem:[%s1 + $0x34] sm:$0xf]
      %v364 = vld [vmem:[%s1 + $0x38] sm:$0xf]
      %v365 = vld [vmem:[%s1 + $0x3c] sm:$0xf]
      %v366 = vld [vmem:[%s1 + $0x40] sm:$0xf]
      %v367 = vld [vmem:[%s1 + $0x44] sm:$0xf]
      %v368 = vld [vmem:[%s1 + $0x48] sm:$0xf]
      %v369 = vld [vmem:[%s1 + $0x4c] sm:$0xf]
      %v370 = vld [vmem:[%s1 + $0x50] sm:$0xf]
      %v371 = vld [vmem:[%s1 + $0x54] sm:$0xf]
      %v372 = vld [vmem:[%s1 + $0x58] sm:$0xf]
      %v373 = vld [vmem:[%s1 + $0x5c] sm:$0xf]
      %v374 = vld [vmem:[%s1 + $0x60] sm:$0xf]
      %v375 = vld [vmem:[%s1 + $0x64] sm:$0xf]
      %v376 = vld [vmem:[%s1 + $0x68] sm:$0xf]
      %v377 = vld [vmem:[%s1 + $0x6c] sm:$0xf]
      %v378 = vld [vmem:[%s1 + $0x70] sm:$0xf]
      %v379 = vld [vmem:[%s1 + $0x74] sm:$0xf]
      %v380 = vld [vmem:[%s1 + $0x78] sm:$0xf]
      %v381 = vld [vmem:[%s1 + $0x7c] sm:$0xf]
      %v382 = vld [vmem:[%s1 + $0x80] sm:$0xf]
      %v383 = vld [vmem:[%s1 + $0x84] sm:$0xf]
      %v384 = vld [vmem:[%s1 + $0x88] sm:$0xf]
      %v385 = vld [vmem:[%s1 + $0x8c] sm:$0xf]
      %v386 = vld [vmem:[%s1 + $0x90] sm:$0xf]
      %v387 = vld [vmem:[%s1 + $0x94] sm:$0xf]
      %v388 = vld [vmem:[%s1 + $0x98] sm:$0xf]
      %v389 = vld [vmem:[%s1 + $0x9c] sm:$0xf]
      %v390 = vld [vmem:[%s1 + $0xa0] sm:$0xf]
      %v391 = vld [vmem:[%s1 + $0xa4] sm:$0xf]
      %v392 = vld [vmem:[%s1 + $0xa8] sm:$0xf]
      %v393 = vld [vmem:[%s1 + $0xac] sm:$0xf]
      %v394 = vld [vmem:[%s1 + $0xb0] sm:$0xf]
      %v395 = vld [vmem:[%s1 + $0xb4] sm:$0xf]
      %v396 = vld [vmem:[%s1 + $0xb8] sm:$0xf]
      %v397 = vld [vmem:[%s1 + $0xbc] sm:$0xf]
      %v398 = vld [vmem:[%s1 + $0xc0] sm:$0xf]
      %v399 = vld [vmem:[%s1 + $0xc4] sm:$0xf]
      %v400 = vld [vmem:[%s1 + $0xc8] sm:$0xf]
      %v401 = vld [vmem:[%s1 + $0xcc] sm:$0xf]
      %v402 = vld [vmem:[%s1 + $0xd0] sm:$0xf]
      %v403 = vld [vmem:[%s1 + $0xd4] sm:$0xf]
      %v404 = vld [vmem:[%s1 + $0xd8] sm:$0xf]
      %v405 = vld [vmem:[%s1 + $0xdc] sm:$0xf]
      %v406 = vld [vmem:[%s1 + $0xe0] sm:$0xf]
      %v407 = vld [vmem:[%s1 + $0xe4] sm:$0xf]
      %v408 = vld [vmem:[%s1 + $0xe8] sm:$0xf]
      %v409 = vld [vmem:[%s1 + $0xec] sm:$0xf]
      %v410 = vld [vmem:[%s1 + $0xf0] sm:$0xf]
      %v411 = vld [vmem:[%s1 + $0xf4] sm:$0xf]
      %v412 = vld [vmem:[%s1 + $0xf8] sm:$0xf]
      %v413 = vld [vmem:[%s1 + $0xfc] sm:$0xf]
      %v414 = vld [vmem:[%s4] sm:$0x1]
      %v415 = vperm.slane %v414, 0
      %v480 = vunpack.c.l.b16 %v350
      %v481 = vunpack.c.l.b16 %v351
      %v482 = vunpack.c.l.b16 %v352
      %v483 = vunpack.c.l.b16 %v353
      %v484 = vunpack.c.l.b16 %v354
      %v485 = vunpack.c.l.b16 %v355
      %v486 = vunpack.c.l.b16 %v356
      %v487 = vunpack.c.l.b16 %v357
      %v488 = vunpack.c.l.b16 %v358
      %v489 = vunpack.c.l.b16 %v359
      %v490 = vunpack.c.l.b16 %v360
      %v491 = vunpack.c.l.b16 %v361
      %v492 = vunpack.c.l.b16 %v362
      %v493 = vunpack.c.l.b16 %v363
      %v494 = vunpack.c.l.b16 %v364
      %v495 = vunpack.c.l.b16 %v365
      %v496 = vunpack.c.l.b16 %v366
      %v497 = vunpack.c.l.b16 %v367
      %v498 = vunpack.c.l.b16 %v368
      %v499 = vunpack.c.l.b16 %v369
      %v500 = vunpack.c.l.b16 %v370
      %v501 = vunpack.c.l.b16 %v371
      %v502 = vunpack.c.l.b16 %v372
      %v503 = vunpack.c.l.b16 %v373
      %v504 = vunpack.c.l.b16 %v374
      %v505 = vunpack.c.l.b16 %v375
      %v506 = vunpack.c.l.b16 %v376
      %v507 = vunpack.c.l.b16 %v377
      %v508 = vunpack.c.l.b16 %v378
      %v509 = vunpack.c.l.b16 %v379
      %v510 = vunpack.c.l.b16 %v380
      %v511 = vunpack.c.l.b16 %v381
      %v512 = vunpack.c.l.b16 %v382
      %v513 = vunpack.c.l.b16 %v383
      %v514 = vunpack.c.l.b16 %v384
      %v515 = vunpack.c.l.b16 %v385
      %v516 = vunpack.c.l.b16 %v386
      %v517 = vunpack.c.l.b16 %v387
      %v518 = vunpack.c.l.b16 %v388
      %v519 = vunpack.c.l.b16 %v389
      %v520 = vunpack.c.l.b16 %v390
      %v521 = vunpack.c.l.b16 %v391
      %v522 = vunpack.c.l.b16 %v392
      %v523 = vunpack.c.l.b16 %v393
      %v524 = vunpack.c.l.b16 %v394
      %v525 = vunpack.c.l.b16 %v395
      %v526 = vunpack.c.l.b16 %v396
      %v527 = vunpack.c.l.b16 %v397
      %v528 = vunpack.c.l.b16 %v398
      %v529 = vunpack.c.l.b16 %v399
      %v530 = vunpack.c.l.b16 %v400
      %v531 = vunpack.c.l.b16 %v401
      %v532 = vunpack.c.l.b16 %v402
      %v533 = vunpack.c.l.b16 %v403
      %v534 = vunpack.c.l.b16 %v404
      %v535 = vunpack.c.l.b16 %v405
      %v536 = vunpack.c.l.b16 %v406
      %v537 = vunpack.c.l.b16 %v407
      %v538 = vunpack.c.l.b16 %v408
      %v539 = vunpack.c.l.b16 %v409
      %v540 = vunpack.c.l.b16 %v410
      %v541 = vunpack.c.l.b16 %v411
      %v542 = vunpack.c.l.b16 %v412
      %v543 = vunpack.c.l.b16 %v413
      %v544 = vpack.c.b16 %v481, %v480
      %v545 = vpack.c.b16 %v483, %v482
      %v546 = vpack.c.b16 %v485, %v484
      %v547 = vpack.c.b16 %v487, %v486
      %v548 = vpack.c.b16 %v489, %v488
      %v549 = vpack.c.b16 %v491, %v490
      %v550 = vpack.c.b16 %v493, %v492
      %v551 = vpack.c.b16 %v495, %v494
      %v552 = vpack.c.b16 %v497, %v496
      %v553 = vpack.c.b16 %v499, %v498
      %v554 = vpack.c.b16 %v501, %v500
      %v555 = vpack.c.b16 %v503, %v502
      %v556 = vpack.c.b16 %v505, %v504
      %v557 = vpack.c.b16 %v507, %v506
      %v558 = vpack.c.b16 %v509, %v508
      %v559 = vpack.c.b16 %v511, %v510
      %v560 = vpack.c.b16 %v513, %v512
      %v561 = vpack.c.b16 %v515, %v514
      %v562 = vpack.c.b16 %v517, %v516
      %v563 = vpack.c.b16 %v519, %v518
      %v564 = vpack.c.b16 %v521, %v520
      %v565 = vpack.c.b16 %v523, %v522
      %v566 = vpack.c.b16 %v525, %v524
      %v567 = vpack.c.b16 %v527, %v526
      %v568 = vpack.c.b16 %v529, %v528
      %v569 = vpack.c.b16 %v531, %v530
      %v570 = vpack.c.b16 %v533, %v532
      %v571 = vpack.c.b16 %v535, %v534
      %v572 = vpack.c.b16 %v537, %v536
      %v573 = vpack.c.b16 %v539, %v538
      %v574 = vpack.c.b16 %v541, %v540
      %v575 = vpack.c.b16 %v543, %v542
      %608 = vmatpush.bf16.msra.mxu0 %v551
      %609 = vmatpush.bf16.msra.mxu0 %v550
      %610 = vmatpush.bf16.msra.mxu0 %v549
      %611 = vmatpush.bf16.msra.mxu0 %v548
      %612 = vmatpush.bf16.msra.mxu0 %v547
      %613 = vmatpush.bf16.msra.mxu0 %v546
      %614 = vmatpush.bf16.msra.mxu0 %v545
      %615 = vmatpush.bf16.msra.mxu0 %v544
      %616 = vmatmul.bf16.gmra.mxu0 %v330
      %v617 = vpop.f32.mrf.mxu0
      %v618 = vadd.f32 %v415, %v617
      %v619 = vpop.f32.mrf.mxu0
      %v620 = vadd.f32 %v415, %v619
      %621 = vmatmul.bf16.gmra.mxu0 %v334
      %v622 = vpop.f32.mrf.mxu0
      %v623 = vadd.f32 %v415, %v622
      %v624 = vpop.f32.mrf.mxu0
      %v625 = vadd.f32 %v415, %v624
      %626 = vmatmul.bf16.gmra.mxu0 %v338
      %v627 = vpop.f32.mrf.mxu0
      %v628 = vadd.f32 %v415, %v627
      %v629 = vpop.f32.mrf.mxu0
      %v630 = vadd.f32 %v415, %v629
      %631 = vmatmul.bf16.gmra.mxu0 %v342
      %v632 = vpop.f32.mrf.mxu0
      %v633 = vadd.f32 %v415, %v632
      %v634 = vpop.f32.mrf.mxu0
      %v635 = vadd.f32 %v415, %v634
      %636 = vmatmul.bf16.gmra.mxu0 %v346
      %v637 = vpop.f32.mrf.mxu0
      %v638 = vadd.f32 %v415, %v637
      %v639 = vpop.f32.mrf.mxu0
      %v640 = vadd.f32 %v415, %v639
      %641 = vdwg.mxu0
      %642 = vmatpush.bf16.msra.mxu0 %v559
      %643 = vmatpush.bf16.msra.mxu0 %v558
      %644 = vmatpush.bf16.msra.mxu0 %v557
      %645 = vmatpush.bf16.msra.mxu0 %v556
      %646 = vmatpush.bf16.msra.mxu0 %v555
      %647 = vmatpush.bf16.msra.mxu0 %v554
      %648 = vmatpush.bf16.msra.mxu0 %v553
      %649 = vmatpush.bf16.msra.mxu0 %v552
      %650 = vmatmul.bf16.gmra.mxu0 %v331
      %v651 = vpop.f32.mrf.mxu0
      %v652 = vadd.f32 %v618, %v651
      %v653 = vpop.f32.mrf.mxu0
      %v654 = vadd.f32 %v620, %v653
      %655 = vmatmul.bf16.gmra.mxu0 %v335
      %v656 = vpop.f32.mrf.mxu0
      %v657 = vadd.f32 %v623, %v656
      %v658 = vpop.f32.mrf.mxu0
      %v659 = vadd.f32 %v625, %v658
      %660 = vmatmul.bf16.gmra.mxu0 %v339
      %v661 = vpop.f32.mrf.mxu0
      %v662 = vadd.f32 %v628, %v661
      %v663 = vpop.f32.mrf.mxu0
      %v664 = vadd.f32 %v630, %v663
      %665 = vmatmul.bf16.gmra.mxu0 %v343
      %v666 = vpop.f32.mrf.mxu0
      %v667 = vadd.f32 %v633, %v666
      %v668 = vpop.f32.mrf.mxu0
      %v669 = vadd.f32 %v635, %v668
      %670 = vmatmul.bf16.gmra.mxu0 %v347
      %v671 = vpop.f32.mrf.mxu0
      %v672 = vadd.f32 %v638, %v671
      %v673 = vpop.f32.mrf.mxu0
      %v674 = vadd.f32 %v640, %v673
      %675 = vdwg.mxu0
      %676 = vmatpush.bf16.msra.mxu0 %v567
      %677 = vmatpush.bf16.msra.mxu0 %v566
      %678 = vmatpush.bf16.msra.mxu0 %v565
      %679 = vmatpush.bf16.msra.mxu0 %v564
      %680 = vmatpush.bf16.msra.mxu0 %v563
      %681 = vmatpush.bf16.msra.mxu0 %v562
      %682 = vmatpush.bf16.msra.mxu0 %v561
      %683 = vmatpush.bf16.msra.mxu0 %v560
      %684 = vmatmul.bf16.gmra.mxu0 %v332
      %v685 = vpop.f32.mrf.mxu0
      %v686 = vadd.f32 %v652, %v685
      %v687 = vpop.f32.mrf.mxu0
      %v688 = vadd.f32 %v654, %v687
      %689 = vmatmul.bf16.gmra.mxu0 %v336
      %v690 = vpop.f32.mrf.mxu0
      %v691 = vadd.f32 %v657, %v690
      %v692 = vpop.f32.mrf.mxu0
      %v693 = vadd.f32 %v659, %v692
      %694 = vmatmul.bf16.gmra.mxu0 %v340
      %v695 = vpop.f32.mrf.mxu0
      %v696 = vadd.f32 %v662, %v695
      %v697 = vpop.f32.mrf.mxu0
      %v698 = vadd.f32 %v664, %v697
      %699 = vmatmul.bf16.gmra.mxu0 %v344
      %v700 = vpop.f32.mrf.mxu0
      %v701 = vadd.f32 %v667, %v700
      %v702 = vpop.f32.mrf.mxu0
      %v703 = vadd.f32 %v669, %v702
      %704 = vmatmul.bf16.gmra.mxu0 %v348
      %v705 = vpop.f32.mrf.mxu0
      %v706 = vadd.f32 %v672, %v705
      %v707 = vpop.f32.mrf.mxu0
      %v708 = vadd.f32 %v674, %v707
      %709 = vdwg.mxu0
      %710 = vmatpush.bf16.msra.mxu0 %v575
      %711 = vmatpush.bf16.msra.mxu0 %v574
      %712 = vmatpush.bf16.msra.mxu0 %v573
      %713 = vmatpush.bf16.msra.mxu0 %v572
      %714 = vmatpush.bf16.msra.mxu0 %v571
      %715 = vmatpush.bf16.msra.mxu0 %v570
      %716 = vmatpush.bf16.msra.mxu0 %v569
      %717 = vmatpush.bf16.msra.mxu0 %v568
      %718 = vmatmul.bf16.gmra.mxu0 %v333
      %v719 = vpop.f32.mrf.mxu0
      %v720 = vadd.f32 %v686, %v719
      %v721 = vpop.f32.mrf.mxu0
      %v722 = vadd.f32 %v688, %v721
      %723 = vmatmul.bf16.gmra.mxu0 %v337
      %v724 = vpop.f32.mrf.mxu0
      %v725 = vadd.f32 %v691, %v724
      %v726 = vpop.f32.mrf.mxu0
      %v727 = vadd.f32 %v693, %v726
      %728 = vmatmul.bf16.gmra.mxu0 %v341
      %v729 = vpop.f32.mrf.mxu0
      %v730 = vadd.f32 %v696, %v729
      %v731 = vpop.f32.mrf.mxu0
      %v732 = vadd.f32 %v698, %v731
      %733 = vmatmul.bf16.gmra.mxu0 %v345
      %v734 = vpop.f32.mrf.mxu0
      %v735 = vadd.f32 %v701, %v734
      %v736 = vpop.f32.mrf.mxu0
      %v737 = vadd.f32 %v703, %v736
      %738 = vmatmul.bf16.gmra.mxu0 %v349
      %v739 = vpop.f32.mrf.mxu0
      %v740 = vadd.f32 %v706, %v739
      %v741 = vpop.f32.mrf.mxu0
      %v742 = vadd.f32 %v708, %v741
      %743 = vdwg.mxu0
      %v744 = vmax.f32 %v720, 0.0
      %v745 = vmax.f32 %v722, 0.0
      %v746 = vmax.f32 %v725, 0.0
      %v747 = vmax.f32 %v727, 0.0
      %v748 = vmax.f32 %v730, 0.0
      %v749 = vmax.f32 %v732, 0.0
      %v750 = vmax.f32 %v735, 0.0
      %v751 = vmax.f32 %v737, 0.0
      %v752 = vmax.f32 %v740, 0.0
      %v753 = vmax.f32 %v742, 0.0
      %755 = vset.pattern.permute.xlu0 0
      %756 = vperm.xlu0 %755, %v252
      %v757 = vpop.permute.xlu0 %756
      %760 = vset.pattern.permute.xlu0 0
      %761 = vperm.xlu0 %760, %v253
      %v762 = vpop.permute.xlu0 %761
      %765 = vset.pattern.permute.xlu0 0
      %766 = vperm.xlu0 %765, %v254
      %v767 = vpop.permute.xlu0 %766
      %770 = vset.pattern.permute.xlu0 0
      %771 = vperm.xlu0 %770, %v255
      %v772 = vpop.permute.xlu0 %771
      %775 = vset.pattern.permute.xlu0 0
      %776 = vperm.xlu0 %775, %v256
      %v777 = vpop.permute.xlu0 %776
      %780 = vset.pattern.permute.xlu0 0
      %781 = vperm.xlu0 %780, %v257
      %v782 = vpop.permute.xlu0 %781
      %785 = vset.pattern.permute.xlu0 0
      %786 = vperm.xlu0 %785, %v258
      %v787 = vpop.permute.xlu0 %786
      %790 = vset.pattern.permute.xlu0 0
      %791 = vperm.xlu0 %790, %v259
      %v792 = vpop.permute.xlu0 %791
      %795 = vset.pattern.permute.xlu0 0
      %796 = vperm.xlu0 %795, %v260
      %v797 = vpop.permute.xlu0 %796
      %800 = vset.pattern.permute.xlu0 0
      %801 = vperm.xlu0 %800, %v261
      %v802 = vpop.permute.xlu0 %801
      %v804 = vmul.f32 %v744, %v757
      %v805 = vmul.f32 %v745, %v762
      %v806 = vmul.f32 %v746, %v767
      %v807 = vmul.f32 %v747, %v772
      %v808 = vmul.f32 %v748, %v777
      %v809 = vmul.f32 %v749, %v782
      %v810 = vmul.f32 %v750, %v787
      %v811 = vmul.f32 %v751, %v792
      %v812 = vmul.f32 %v752, %v797
      %v813 = vmul.f32 %v753, %v802
      %814 = vst [vmem:[#allocation2 + $0xb] sm:$0xff] %v804
      %815 = vst [vmem:[#allocation2 + $0x13] sm:$0xff] %v805
      %816 = vst [vmem:[#allocation2 + $0x1b] sm:$0xff] %v806
      %817 = vst [vmem:[#allocation2 + $0x23] sm:$0xff] %v807
      %818 = vst [vmem:[#allocation2 + $0x2b] sm:$0xff] %v808
      %819 = vst [vmem:[#allocation2 + $0x33] sm:$0xff] %v809
      %820 = vst [vmem:[#allocation2 + $0x3b] sm:$0xff] %v810
      %821 = vst [vmem:[#allocation2 + $0x43] sm:$0xff] %v811
      %822 = vst [vmem:[#allocation2 + $0x4b] sm:$0xff] %v812
      %823 = vst [vmem:[#allocation2 + $0x53] sm:$0xff] %v813
      %v824 = vld [vmem:[#allocation2] sm:$0xff]
      %v825 = vld [vmem:[#allocation2 + $0x8] sm:$0xff]
      %v826 = vld [vmem:[#allocation2 + $0x10] sm:$0xff]
      %v827 = vld [vmem:[#allocation2 + $0x18] sm:$0xff]
      %v828 = vld [vmem:[#allocation2 + $0x20] sm:$0xff]
      %v829 = vld [vmem:[#allocation2 + $0x28] sm:$0xff]
      %v830 = vld [vmem:[#allocation2 + $0x30] sm:$0xff]
      %v831 = vld [vmem:[#allocation2 + $0x38] sm:$0xff]
      %v832 = vld [vmem:[#allocation2 + $0x40] sm:$0xff]
      %v833 = vld [vmem:[#allocation2 + $0x48] sm:$0xff]
      %v834 = vld [vmem:[#allocation2 + $0x1] sm:$0xff]
      %v835 = vld [vmem:[#allocation2 + $0x9] sm:$0xff]
      %v836 = vld [vmem:[#allocation2 + $0x11] sm:$0xff]
      %v837 = vld [vmem:[#allocation2 + $0x19] sm:$0xff]
      %v838 = vld [vmem:[#allocation2 + $0x21] sm:$0xff]
      %v839 = vld [vmem:[#allocation2 + $0x29] sm:$0xff]
      %v840 = vld [vmem:[#allocation2 + $0x31] sm:$0xff]
      %v841 = vld [vmem:[#allocation2 + $0x39] sm:$0xff]
      %v842 = vld [vmem:[#allocation2 + $0x41] sm:$0xff]
      %v843 = vld [vmem:[#allocation2 + $0x49] sm:$0xff]
      %v844 = vld [vmem:[#allocation2 + $0x2] sm:$0xff]
      %v845 = vld [vmem:[#allocation2 + $0xa] sm:$0xff]
      %v846 = vld [vmem:[#allocation2 + $0x12] sm:$0xff]
      %v847 = vld [vmem:[#allocation2 + $0x1a] sm:$0xff]
      %v848 = vld [vmem:[#allocation2 + $0x22] sm:$0xff]
      %v849 = vld [vmem:[#allocation2 + $0x2a] sm:$0xff]
      %v850 = vld [vmem:[#allocation2 + $0x32] sm:$0xff]
      %v851 = vld [vmem:[#allocation2 + $0x3a] sm:$0xff]
      %v852 = vld [vmem:[#allocation2 + $0x42] sm:$0xff]
      %v853 = vld [vmem:[#allocation2 + $0x4a] sm:$0xff]
      %v854 = vld [vmem:[#allocation2 + $0x52] sm:$0xff]
      %v855 = vld [vmem:[#allocation2 + $0xb] sm:$0xff]
      %v856 = vld [vmem:[#allocation2 + $0x13] sm:$0xff]
      %v857 = vld [vmem:[#allocation2 + $0x1b] sm:$0xff]
      %v858 = vld [vmem:[#allocation2 + $0x23] sm:$0xff]
      %v859 = vld [vmem:[#allocation2 + $0x2b] sm:$0xff]
      %v860 = vld [vmem:[#allocation2 + $0x33] sm:$0xff]
      %v861 = vld [vmem:[#allocation2 + $0x3b] sm:$0xff]
      %v862 = vld [vmem:[#allocation2 + $0x43] sm:$0xff]
      %v863 = vld [vmem:[#allocation2 + $0x4b] sm:$0xff]
      %v864 = vld [vmem:[#allocation2 + $0x53] sm:$0xff]
      %v865 = vld [vmem:[#allocation2 + $0xc] sm:$0xff]
      %v866 = vld [vmem:[#allocation2 + $0x14] sm:$0xff]
      %v867 = vld [vmem:[#allocation2 + $0x1c] sm:$0xff]
      %v868 = vld [vmem:[#allocation2 + $0x24] sm:$0xff]
      %v869 = vld [vmem:[#allocation2 + $0x2c] sm:$0xff]
      %v870 = vld [vmem:[#allocation2 + $0x34] sm:$0xff]
      %v871 = vld [vmem:[#allocation2 + $0x3c] sm:$0xff]
      %v872 = vld [vmem:[#allocation2 + $0x44] sm:$0xff]
      %v873 = vld [vmem:[#allocation2 + $0x4c] sm:$0xff]
      %v874 = vld [vmem:[#allocation2 + $0x54] sm:$0xff]
      %v875 = vld [vmem:[#allocation2 + $0x5c] sm:$0xff]
      %v876 = vld [vmem:[#allocation2 + $0x15] sm:$0xff]
      %v877 = vld [vmem:[#allocation2 + $0x1d] sm:$0xff]
      %v878 = vld [vmem:[#allocation2 + $0x25] sm:$0xff]
      %v879 = vld [vmem:[#allocation2 + $0x2d] sm:$0xff]
      %v880 = vld [vmem:[#allocation2 + $0x35] sm:$0xff]
      %v881 = vld [vmem:[#allocation2 + $0x3d] sm:$0xff]
      %v882 = vld [vmem:[#allocation2 + $0x45] sm:$0xff]
      %v883 = vld [vmem:[#allocation2 + $0x4d] sm:$0xff]
      %v884 = vld [vmem:[#allocation2 + $0x55] sm:$0xff]
      %v885 = vld [vmem:[#allocation2 + $0x5d] sm:$0xff]
      %v886 = vld [vmem:[#allocation2 + $0x16] sm:$0xff]
      %v887 = vld [vmem:[#allocation2 + $0x1e] sm:$0xff]
      %v888 = vld [vmem:[#allocation2 + $0x26] sm:$0xff]
      %v889 = vld [vmem:[#allocation2 + $0x2e] sm:$0xff]
      %v890 = vld [vmem:[#allocation2 + $0x36] sm:$0xff]
      %v891 = vld [vmem:[#allocation2 + $0x3e] sm:$0xff]
      %v892 = vld [vmem:[#allocation2 + $0x46] sm:$0xff]
      %v893 = vld [vmem:[#allocation2 + $0x4e] sm:$0xff]
      %v894 = vld [vmem:[#allocation2 + $0x56] sm:$0xff]
      %v895 = vld [vmem:[#allocation2 + $0x5e] sm:$0xff]
      %v896 = vpack.c.bf16 %v825, %v824
      %v897 = vpack.c.bf16 %v835, %v834
      %v898 = vpack.c.bf16 %v845, %v844
      %v899 = vpack.c.bf16 %v846, %v845
      %v900 = vpack.c.bf16 %v856, %v855
      %v901 = vpack.c.bf16 %v866, %v865
      %v902 = vpack.c.bf16 %v867, %v866
      %v903 = vpack.c.bf16 %v877, %v876
      %v904 = vpack.c.bf16 %v887, %v886
      %v905 = vpack.c.bf16 %v827, %v826
      %v906 = vpack.c.bf16 %v837, %v836
      %v907 = vpack.c.bf16 %v847, %v846
      %v908 = vpack.c.bf16 %v848, %v847
      %v909 = vpack.c.bf16 %v858, %v857
      %v910 = vpack.c.bf16 %v868, %v867
      %v911 = vpack.c.bf16 %v869, %v868
      %v912 = vpack.c.bf16 %v879, %v878
      %v913 = vpack.c.bf16 %v889, %v888
      %v914 = vpack.c.bf16 %v829, %v828
      %v915 = vpack.c.bf16 %v839, %v838
      %v916 = vpack.c.bf16 %v849, %v848
      %v917 = vpack.c.bf16 %v850, %v849
      %v918 = vpack.c.bf16 %v860, %v859
      %v919 = vpack.c.bf16 %v870, %v869
      %v920 = vpack.c.bf16 %v871, %v870
      %v921 = vpack.c.bf16 %v881, %v880
      %v922 = vpack.c.bf16 %v891, %v890
      %v923 = vpack.c.bf16 %v831, %v830
      %v924 = vpack.c.bf16 %v841, %v840
      %v925 = vpack.c.bf16 %v851, %v850
      %v926 = vpack.c.bf16 %v852, %v851
      %v927 = vpack.c.bf16 %v862, %v861
      %v928 = vpack.c.bf16 %v872, %v871
      %v929 = vpack.c.bf16 %v873, %v872
      %v930 = vpack.c.bf16 %v883, %v882
      %v931 = vpack.c.bf16 %v893, %v892
      %v932 = vpack.c.bf16 %v833, %v832
      %v933 = vpack.c.bf16 %v843, %v842
      %v934 = vpack.c.bf16 %v853, %v852
      %v935 = vpack.c.bf16 %v854, %v853
      %v936 = vpack.c.bf16 %v864, %v863
      %v937 = vpack.c.bf16 %v874, %v873
      %v938 = vpack.c.bf16 %v875, %v874
      %v939 = vpack.c.bf16 %v885, %v884
      %v940 = vpack.c.bf16 %v895, %v894
      %v941 = vld [vmem:[%s2] sm:$0xf]
      %v942 = vld [vmem:[%s2 + $0x4] sm:$0xf]
      %v943 = vld [vmem:[%s2 + $0x8] sm:$0xf]
      %v944 = vld [vmem:[%s2 + $0xc] sm:$0xf]
      %v945 = vld [vmem:[%s2 + $0x10] sm:$0xf]
      %v946 = vld [vmem:[%s2 + $0x14] sm:$0xf]
      %v947 = vld [vmem:[%s2 + $0x18] sm:$0xf]
      %v948 = vld [vmem:[%s2 + $0x1c] sm:$0xf]
      %v949 = vld [vmem:[%s2 + $0x20] sm:$0xf]
      %v950 = vld [vmem:[%s2 + $0x24] sm:$0xf]
      %v951 = vld [vmem:[%s2 + $0x28] sm:$0xf]
      %v952 = vld [vmem:[%s2 + $0x2c] sm:$0xf]
      %v953 = vld [vmem:[%s2 + $0x30] sm:$0xf]
      %v954 = vld [vmem:[%s2 + $0x34] sm:$0xf]
      %v955 = vld [vmem:[%s2 + $0x38] sm:$0xf]
      %v956 = vld [vmem:[%s2 + $0x3c] sm:$0xf]
      %v957 = vld [vmem:[%s2 + $0x40] sm:$0xf]
      %v958 = vld [vmem:[%s2 + $0x44] sm:$0xf]
      %v959 = vld [vmem:[%s2 + $0x48] sm:$0xf]
      %v960 = vld [vmem:[%s2 + $0x4c] sm:$0xf]
      %v961 = vld [vmem:[%s2 + $0x50] sm:$0xf]
      %v962 = vld [vmem:[%s2 + $0x54] sm:$0xf]
      %v963 = vld [vmem:[%s2 + $0x58] sm:$0xf]
      %v964 = vld [vmem:[%s2 + $0x5c] sm:$0xf]
      %v965 = vld [vmem:[%s2 + $0x60] sm:$0xf]
      %v966 = vld [vmem:[%s2 + $0x64] sm:$0xf]
      %v967 = vld [vmem:[%s2 + $0x68] sm:$0xf]
      %v968 = vld [vmem:[%s2 + $0x6c] sm:$0xf]
      %v969 = vld [vmem:[%s2 + $0x70] sm:$0xf]
      %v970 = vld [vmem:[%s2 + $0x74] sm:$0xf]
      %v971 = vld [vmem:[%s2 + $0x78] sm:$0xf]
      %v972 = vld [vmem:[%s2 + $0x7c] sm:$0xf]
      %v973 = vld [vmem:[%s2 + $0x80] sm:$0xf]
      %v974 = vld [vmem:[%s2 + $0x84] sm:$0xf]
      %v975 = vld [vmem:[%s2 + $0x88] sm:$0xf]
      %v976 = vld [vmem:[%s2 + $0x8c] sm:$0xf]
      %v977 = vld [vmem:[%s2 + $0x90] sm:$0xf]
      %v978 = vld [vmem:[%s2 + $0x94] sm:$0xf]
      %v979 = vld [vmem:[%s2 + $0x98] sm:$0xf]
      %v980 = vld [vmem:[%s2 + $0x9c] sm:$0xf]
      %v981 = vld [vmem:[%s2 + $0xa0] sm:$0xf]
      %v982 = vld [vmem:[%s2 + $0xa4] sm:$0xf]
      %v983 = vld [vmem:[%s2 + $0xa8] sm:$0xf]
      %v984 = vld [vmem:[%s2 + $0xac] sm:$0xf]
      %v985 = vld [vmem:[%s2 + $0xb0] sm:$0xf]
      %v986 = vld [vmem:[%s2 + $0xb4] sm:$0xf]
      %v987 = vld [vmem:[%s2 + $0xb8] sm:$0xf]
      %v988 = vld [vmem:[%s2 + $0xbc] sm:$0xf]
      %v989 = vld [vmem:[%s2 + $0xc0] sm:$0xf]
      %v990 = vld [vmem:[%s2 + $0xc4] sm:$0xf]
      %v991 = vld [vmem:[%s2 + $0xc8] sm:$0xf]
      %v992 = vld [vmem:[%s2 + $0xcc] sm:$0xf]
      %v993 = vld [vmem:[%s2 + $0xd0] sm:$0xf]
      %v994 = vld [vmem:[%s2 + $0xd4] sm:$0xf]
      %v995 = vld [vmem:[%s2 + $0xd8] sm:$0xf]
      %v996 = vld [vmem:[%s2 + $0xdc] sm:$0xf]
      %v997 = vld [vmem:[%s2 + $0xe0] sm:$0xf]
      %v998 = vld [vmem:[%s2 + $0xe4] sm:$0xf]
      %v999 = vld [vmem:[%s2 + $0xe8] sm:$0xf]
      %v1000 = vld [vmem:[%s2 + $0xec] sm:$0xf]
      %v1001 = vld [vmem:[%s2 + $0xf0] sm:$0xf]
      %v1002 = vld [vmem:[%s2 + $0xf4] sm:$0xf]
      %v1003 = vld [vmem:[%s2 + $0xf8] sm:$0xf]
      %v1004 = vld [vmem:[%s2 + $0xfc] sm:$0xf]
      %v1005 = vld [vmem:[%s2 + $0x100] sm:$0xf]
      %v1006 = vld [vmem:[%s2 + $0x104] sm:$0xf]
      %v1007 = vld [vmem:[%s2 + $0x108] sm:$0xf]
      %v1008 = vld [vmem:[%s2 + $0x10c] sm:$0xf]
      %v1009 = vld [vmem:[%s2 + $0x110] sm:$0xf]
      %v1010 = vld [vmem:[%s2 + $0x114] sm:$0xf]
      %v1011 = vld [vmem:[%s2 + $0x118] sm:$0xf]
      %v1012 = vld [vmem:[%s2 + $0x11c] sm:$0xf]
      %v1013 = vld [vmem:[%s2 + $0x120] sm:$0xf]
      %v1014 = vld [vmem:[%s2 + $0x124] sm:$0xf]
      %v1015 = vld [vmem:[%s2 + $0x128] sm:$0xf]
      %v1016 = vld [vmem:[%s2 + $0x12c] sm:$0xf]
      %v1017 = vld [vmem:[%s2 + $0x130] sm:$0xf]
      %v1018 = vld [vmem:[%s2 + $0x134] sm:$0xf]
      %v1019 = vld [vmem:[%s2 + $0x138] sm:$0xf]
      %v1020 = vld [vmem:[%s2 + $0x13c] sm:$0xf]
      %v1021 = vld [vmem:[%s2 + $0x140] sm:$0xf]
      %v1022 = vld [vmem:[%s2 + $0x144] sm:$0xf]
      %v1023 = vld [vmem:[%s2 + $0x148] sm:$0xf]
      %v1024 = vld [vmem:[%s2 + $0x14c] sm:$0xf]
      %v1025 = vld [vmem:[%s2 + $0x150] sm:$0xf]
      %v1026 = vld [vmem:[%s2 + $0x154] sm:$0xf]
      %v1027 = vld [vmem:[%s2 + $0x158] sm:$0xf]
      %v1028 = vld [vmem:[%s2 + $0x15c] sm:$0xf]
      %v1029 = vld [vmem:[%s2 + $0x160] sm:$0xf]
      %v1030 = vld [vmem:[%s2 + $0x164] sm:$0xf]
      %v1031 = vld [vmem:[%s2 + $0x168] sm:$0xf]
      %v1032 = vld [vmem:[%s2 + $0x16c] sm:$0xf]
      %v1033 = vld [vmem:[%s2 + $0x170] sm:$0xf]
      %v1034 = vld [vmem:[%s2 + $0x174] sm:$0xf]
      %v1035 = vld [vmem:[%s2 + $0x178] sm:$0xf]
      %v1036 = vld [vmem:[%s2 + $0x17c] sm:$0xf]
      %v1037 = vld [vmem:[%s2 + $0x180] sm:$0xf]
      %v1038 = vld [vmem:[%s2 + $0x184] sm:$0xf]
      %v1039 = vld [vmem:[%s2 + $0x188] sm:$0xf]
      %v1040 = vld [vmem:[%s2 + $0x18c] sm:$0xf]
      %v1041 = vld [vmem:[%s2 + $0x190] sm:$0xf]
      %v1042 = vld [vmem:[%s2 + $0x194] sm:$0xf]
      %v1043 = vld [vmem:[%s2 + $0x198] sm:$0xf]
      %v1044 = vld [vmem:[%s2 + $0x19c] sm:$0xf]
      %v1045 = vld [vmem:[%s2 + $0x1a0] sm:$0xf]
      %v1046 = vld [vmem:[%s2 + $0x1a4] sm:$0xf]
      %v1047 = vld [vmem:[%s2 + $0x1a8] sm:$0xf]
      %v1048 = vld [vmem:[%s2 + $0x1ac] sm:$0xf]
      %v1049 = vld [vmem:[%s2 + $0x1b0] sm:$0xf]
      %v1050 = vld [vmem:[%s2 + $0x1b4] sm:$0xf]
      %v1051 = vld [vmem:[%s2 + $0x1b8] sm:$0xf]
      %v1052 = vld [vmem:[%s2 + $0x1bc] sm:$0xf]
      %v1053 = vld [vmem:[%s2 + $0x1c0] sm:$0xf]
      %v1054 = vld [vmem:[%s2 + $0x1c4] sm:$0xf]
      %v1055 = vld [vmem:[%s2 + $0x1c8] sm:$0xf]
      %v1056 = vld [vmem:[%s2 + $0x1cc] sm:$0xf]
      %v1057 = vld [vmem:[%s2 + $0x1d0] sm:$0xf]
      %v1058 = vld [vmem:[%s2 + $0x1d4] sm:$0xf]
      %v1059 = vld [vmem:[%s2 + $0x1d8] sm:$0xf]
      %v1060 = vld [vmem:[%s2 + $0x1dc] sm:$0xf]
      %v1061 = vld [vmem:[%s2 + $0x1e0] sm:$0xf]
      %v1062 = vld [vmem:[%s2 + $0x1e4] sm:$0xf]
      %v1063 = vld [vmem:[%s2 + $0x1e8] sm:$0xf]
      %v1064 = vld [vmem:[%s2 + $0x1ec] sm:$0xf]
      %v1065 = vld [vmem:[%s2 + $0x1f0] sm:$0xf]
      %v1066 = vld [vmem:[%s2 + $0x1f4] sm:$0xf]
      %v1067 = vld [vmem:[%s2 + $0x1f8] sm:$0xf]
      %v1068 = vld [vmem:[%s2 + $0x1fc] sm:$0xf]
      %v1069 = vld [vmem:[%s2 + $0x200] sm:$0xf]
      %v1070 = vld [vmem:[%s2 + $0x204] sm:$0xf]
      %v1071 = vld [vmem:[%s2 + $0x208] sm:$0xf]
      %v1072 = vld [vmem:[%s2 + $0x20c] sm:$0xf]
      %v1073 = vld [vmem:[%s2 + $0x210] sm:$0xf]
      %v1074 = vld [vmem:[%s2 + $0x214] sm:$0xf]
      %v1075 = vld [vmem:[%s2 + $0x218] sm:$0xf]
      %v1076 = vld [vmem:[%s2 + $0x21c] sm:$0xf]
      %v1077 = vld [vmem:[%s2 + $0x220] sm:$0xf]
      %v1078 = vld [vmem:[%s2 + $0x224] sm:$0xf]
      %v1079 = vld [vmem:[%s2 + $0x228] sm:$0xf]
      %v1080 = vld [vmem:[%s2 + $0x22c] sm:$0xf]
      %v1081 = vld [vmem:[%s2 + $0x230] sm:$0xf]
      %v1082 = vld [vmem:[%s2 + $0x234] sm:$0xf]
      %v1083 = vld [vmem:[%s2 + $0x238] sm:$0xf]
      %v1084 = vld [vmem:[%s2 + $0x23c] sm:$0xf]
      %v1085 = vld [vmem:[%s4 + $0x1] sm:$0x1]
      %v1086 = vperm.slane %v1085, 0
      %v1231 = vunpack.c.l.b16 %v941
      %v1232 = vunpack.c.l.b16 %v942
      %v1233 = vunpack.c.l.b16 %v943
      %v1234 = vunpack.c.l.b16 %v944
      %v1235 = vunpack.c.l.b16 %v945
      %v1236 = vunpack.c.l.b16 %v946
      %v1237 = vunpack.c.l.b16 %v947
      %v1238 = vunpack.c.l.b16 %v948
      %v1239 = vunpack.c.l.b16 %v949
      %v1240 = vunpack.c.l.b16 %v950
      %v1241 = vunpack.c.l.b16 %v951
      %v1242 = vunpack.c.l.b16 %v952
      %v1243 = vunpack.c.l.b16 %v953
      %v1244 = vunpack.c.l.b16 %v954
      %v1245 = vunpack.c.l.b16 %v955
      %v1246 = vunpack.c.l.b16 %v956
      %v1247 = vunpack.c.l.b16 %v957
      %v1248 = vunpack.c.l.b16 %v958
      %v1249 = vunpack.c.l.b16 %v959
      %v1250 = vunpack.c.l.b16 %v960
      %v1251 = vunpack.c.l.b16 %v961
      %v1252 = vunpack.c.l.b16 %v962
      %v1253 = vunpack.c.l.b16 %v963
      %v1254 = vunpack.c.l.b16 %v964
      %v1255 = vunpack.c.l.b16 %v965
      %v1256 = vunpack.c.l.b16 %v966
      %v1257 = vunpack.c.l.b16 %v967
      %v1258 = vunpack.c.l.b16 %v968
      %v1259 = vunpack.c.l.b16 %v969
      %v1260 = vunpack.c.l.b16 %v970
      %v1261 = vunpack.c.l.b16 %v971
      %v1262 = vunpack.c.l.b16 %v972
      %v1263 = vunpack.c.l.b16 %v973
      %v1264 = vunpack.c.l.b16 %v974
      %v1265 = vunpack.c.l.b16 %v975
      %v1266 = vunpack.c.l.b16 %v976
      %v1267 = vunpack.c.l.b16 %v977
      %v1268 = vunpack.c.l.b16 %v978
      %v1269 = vunpack.c.l.b16 %v979
      %v1270 = vunpack.c.l.b16 %v980
      %v1271 = vunpack.c.l.b16 %v981
      %v1272 = vunpack.c.l.b16 %v982
      %v1273 = vunpack.c.l.b16 %v983
      %v1274 = vunpack.c.l.b16 %v984
      %v1275 = vunpack.c.l.b16 %v985
      %v1276 = vunpack.c.l.b16 %v986
      %v1277 = vunpack.c.l.b16 %v987
      %v1278 = vunpack.c.l.b16 %v988
      %v1279 = vunpack.c.l.b16 %v989
      %v1280 = vunpack.c.l.b16 %v990
      %v1281 = vunpack.c.l.b16 %v991
      %v1282 = vunpack.c.l.b16 %v992
      %v1283 = vunpack.c.l.b16 %v993
      %v1284 = vunpack.c.l.b16 %v994
      %v1285 = vunpack.c.l.b16 %v995
      %v1286 = vunpack.c.l.b16 %v996
      %v1287 = vunpack.c.l.b16 %v997
      %v1288 = vunpack.c.l.b16 %v998
      %v1289 = vunpack.c.l.b16 %v999
      %v1290 = vunpack.c.l.b16 %v1000
      %v1291 = vunpack.c.l.b16 %v1001
      %v1292 = vunpack.c.l.b16 %v1002
      %v1293 = vunpack.c.l.b16 %v1003
      %v1294 = vunpack.c.l.b16 %v1004
      %v1295 = vunpack.c.l.b16 %v1005
      %v1296 = vunpack.c.l.b16 %v1006
      %v1297 = vunpack.c.l.b16 %v1007
      %v1298 = vunpack.c.l.b16 %v1008
      %v1299 = vunpack.c.l.b16 %v1009
      %v1300 = vunpack.c.l.b16 %v1010
      %v1301 = vunpack.c.l.b16 %v1011
      %v1302 = vunpack.c.l.b16 %v1012
      %v1303 = vunpack.c.l.b16 %v1013
      %v1304 = vunpack.c.l.b16 %v1014
      %v1305 = vunpack.c.l.b16 %v1015
      %v1306 = vunpack.c.l.b16 %v1016
      %v1307 = vunpack.c.l.b16 %v1017
      %v1308 = vunpack.c.l.b16 %v1018
      %v1309 = vunpack.c.l.b16 %v1019
      %v1310 = vunpack.c.l.b16 %v1020
      %v1311 = vunpack.c.l.b16 %v1021
      %v1312 = vunpack.c.l.b16 %v1022
      %v1313 = vunpack.c.l.b16 %v1023
      %v1314 = vunpack.c.l.b16 %v1024
      %v1315 = vunpack.c.l.b16 %v1025
      %v1316 = vunpack.c.l.b16 %v1026
      %v1317 = vunpack.c.l.b16 %v1027
      %v1318 = vunpack.c.l.b16 %v1028
      %v1319 = vunpack.c.l.b16 %v1029
      %v1320 = vunpack.c.l.b16 %v1030
      %v1321 = vunpack.c.l.b16 %v1031
      %v1322 = vunpack.c.l.b16 %v1032
      %v1323 = vunpack.c.l.b16 %v1033
      %v1324 = vunpack.c.l.b16 %v1034
      %v1325 = vunpack.c.l.b16 %v1035
      %v1326 = vunpack.c.l.b16 %v1036
      %v1327 = vunpack.c.l.b16 %v1037
      %v1328 = vunpack.c.l.b16 %v1038
      %v1329 = vunpack.c.l.b16 %v1039
      %v1330 = vunpack.c.l.b16 %v1040
      %v1331 = vunpack.c.l.b16 %v1041
      %v1332 = vunpack.c.l.b16 %v1042
      %v1333 = vunpack.c.l.b16 %v1043
      %v1334 = vunpack.c.l.b16 %v1044
      %v1335 = vunpack.c.l.b16 %v1045
      %v1336 = vunpack.c.l.b16 %v1046
      %v1337 = vunpack.c.l.b16 %v1047
      %v1338 = vunpack.c.l.b16 %v1048
      %v1339 = vunpack.c.l.b16 %v1049
      %v1340 = vunpack.c.l.b16 %v1050
      %v1341 = vunpack.c.l.b16 %v1051
      %v1342 = vunpack.c.l.b16 %v1052
      %v1343 = vunpack.c.l.b16 %v1053
      %v1344 = vunpack.c.l.b16 %v1054
      %v1345 = vunpack.c.l.b16 %v1055
      %v1346 = vunpack.c.l.b16 %v1056
      %v1347 = vunpack.c.l.b16 %v1057
      %v1348 = vunpack.c.l.b16 %v1058
      %v1349 = vunpack.c.l.b16 %v1059
      %v1350 = vunpack.c.l.b16 %v1060
      %v1351 = vunpack.c.l.b16 %v1061
      %v1352 = vunpack.c.l.b16 %v1062
      %v1353 = vunpack.c.l.b16 %v1063
      %v1354 = vunpack.c.l.b16 %v1064
      %v1355 = vunpack.c.l.b16 %v1065
      %v1356 = vunpack.c.l.b16 %v1066
      %v1357 = vunpack.c.l.b16 %v1067
      %v1358 = vunpack.c.l.b16 %v1068
      %v1359 = vunpack.c.l.b16 %v1069
      %v1360 = vunpack.c.l.b16 %v1070
      %v1361 = vunpack.c.l.b16 %v1071
      %v1362 = vunpack.c.l.b16 %v1072
      %v1363 = vunpack.c.l.b16 %v1073
      %v1364 = vunpack.c.l.b16 %v1074
      %v1365 = vunpack.c.l.b16 %v1075
      %v1366 = vunpack.c.l.b16 %v1076
      %v1367 = vunpack.c.l.b16 %v1077
      %v1368 = vunpack.c.l.b16 %v1078
      %v1369 = vunpack.c.l.b16 %v1079
      %v1370 = vunpack.c.l.b16 %v1080
      %v1371 = vunpack.c.l.b16 %v1081
      %v1372 = vunpack.c.l.b16 %v1082
      %v1373 = vunpack.c.l.b16 %v1083
      %v1374 = vunpack.c.l.b16 %v1084
      %v1375 = vpack.c.b16 %v1232, %v1231
      %v1376 = vpack.c.b16 %v1234, %v1233
      %v1377 = vpack.c.b16 %v1236, %v1235
      %v1378 = vpack.c.b16 %v1238, %v1237
      %v1379 = vpack.c.b16 %v1240, %v1239
      %v1380 = vpack.c.b16 %v1242, %v1241
      %v1381 = vpack.c.b16 %v1244, %v1243
      %v1382 = vpack.c.b16 %v1246, %v1245
      %v1383 = vpack.c.b16 %v1248, %v1247
      %v1384 = vpack.c.b16 %v1250, %v1249
      %v1385 = vpack.c.b16 %v1252, %v1251
      %v1386 = vpack.c.b16 %v1254, %v1253
      %v1387 = vpack.c.b16 %v1256, %v1255
      %v1388 = vpack.c.b16 %v1258, %v1257
      %v1389 = vpack.c.b16 %v1260, %v1259
      %v1390 = vpack.c.b16 %v1262, %v1261
      %v1391 = vpack.c.b16 %v1264, %v1263
      %v1392 = vpack.c.b16 %v1266, %v1265
      %v1393 = vpack.c.b16 %v1268, %v1267
      %v1394 = vpack.c.b16 %v1270, %v1269
      %v1395 = vpack.c.b16 %v1272, %v1271
      %v1396 = vpack.c.b16 %v1274, %v1273
      %v1397 = vpack.c.b16 %v1276, %v1275
      %v1398 = vpack.c.b16 %v1278, %v1277
      %v1399 = vpack.c.b16 %v1280, %v1279
      %v1400 = vpack.c.b16 %v1282, %v1281
      %v1401 = vpack.c.b16 %v1284, %v1283
      %v1402 = vpack.c.b16 %v1286, %v1285
      %v1403 = vpack.c.b16 %v1288, %v1287
      %v1404 = vpack.c.b16 %v1290, %v1289
      %v1405 = vpack.c.b16 %v1292, %v1291
      %v1406 = vpack.c.b16 %v1294, %v1293
      %v1407 = vpack.c.b16 %v1296, %v1295
      %v1408 = vpack.c.b16 %v1298, %v1297
      %v1409 = vpack.c.b16 %v1300, %v1299
      %v1410 = vpack.c.b16 %v1302, %v1301
      %v1411 = vpack.c.b16 %v1304, %v1303
      %v1412 = vpack.c.b16 %v1306, %v1305
      %v1413 = vpack.c.b16 %v1308, %v1307
      %v1414 = vpack.c.b16 %v1310, %v1309
      %v1415 = vpack.c.b16 %v1312, %v1311
      %v1416 = vpack.c.b16 %v1314, %v1313
      %v1417 = vpack.c.b16 %v1316, %v1315
      %v1418 = vpack.c.b16 %v1318, %v1317
      %v1419 = vpack.c.b16 %v1320, %v1319
      %v1420 = vpack.c.b16 %v1322, %v1321
      %v1421 = vpack.c.b16 %v1324, %v1323
      %v1422 = vpack.c.b16 %v1326, %v1325
      %v1423 = vpack.c.b16 %v1328, %v1327
      %v1424 = vpack.c.b16 %v1330, %v1329
      %v1425 = vpack.c.b16 %v1332, %v1331
      %v1426 = vpack.c.b16 %v1334, %v1333
      %v1427 = vpack.c.b16 %v1336, %v1335
      %v1428 = vpack.c.b16 %v1338, %v1337
      %v1429 = vpack.c.b16 %v1340, %v1339
      %v1430 = vpack.c.b16 %v1342, %v1341
      %v1431 = vpack.c.b16 %v1344, %v1343
      %v1432 = vpack.c.b16 %v1346, %v1345
      %v1433 = vpack.c.b16 %v1348, %v1347
      %v1434 = vpack.c.b16 %v1350, %v1349
      %v1435 = vpack.c.b16 %v1352, %v1351
      %v1436 = vpack.c.b16 %v1354, %v1353
      %v1437 = vpack.c.b16 %v1356, %v1355
      %v1438 = vpack.c.b16 %v1358, %v1357
      %v1439 = vpack.c.b16 %v1360, %v1359
      %v1440 = vpack.c.b16 %v1362, %v1361
      %v1441 = vpack.c.b16 %v1364, %v1363
      %v1442 = vpack.c.b16 %v1366, %v1365
      %v1443 = vpack.c.b16 %v1368, %v1367
      %v1444 = vpack.c.b16 %v1370, %v1369
      %v1445 = vpack.c.b16 %v1372, %v1371
      %v1446 = vpack.c.b16 %v1374, %v1373
      %1519 = vmatpush.bf16.msra.mxu0 %v1382
      %1520 = vmatpush.bf16.msra.mxu0 %v1381
      %1521 = vmatpush.bf16.msra.mxu0 %v1380
      %1522 = vmatpush.bf16.msra.mxu0 %v1379
      %1523 = vmatpush.bf16.msra.mxu0 %v1378
      %1524 = vmatpush.bf16.msra.mxu0 %v1377
      %1525 = vmatpush.bf16.msra.mxu0 %v1376
      %1526 = vmatpush.bf16.msra.mxu0 %v1375
      %1527 = vmatmul.bf16.gmra.mxu0 %v896
      %v1528 = vpop.f32.mrf.mxu0
      %v1529 = vadd.f32 %v1086, %v1528
      %v1530 = vpop.f32.mrf.mxu0
      %v1531 = vadd.f32 %v1086, %v1530
      %1532 = vmatmul.bf16.gmra.mxu0 %v905
      %v1533 = vpop.f32.mrf.mxu0
      %v1534 = vadd.f32 %v1086, %v1533
      %v1535 = vpop.f32.mrf.mxu0
      %v1536 = vadd.f32 %v1086, %v1535
      %1537 = vmatmul.bf16.gmra.mxu0 %v914
      %v1538 = vpop.f32.mrf.mxu0
      %v1539 = vadd.f32 %v1086, %v1538
      %v1540 = vpop.f32.mrf.mxu0
      %v1541 = vadd.f32 %v1086, %v1540
      %1542 = vmatmul.bf16.gmra.mxu0 %v923
      %v1543 = vpop.f32.mrf.mxu0
      %v1544 = vadd.f32 %v1086, %v1543
      %v1545 = vpop.f32.mrf.mxu0
      %v1546 = vadd.f32 %v1086, %v1545
      %1547 = vmatmul.bf16.gmra.mxu0 %v932
      %v1548 = vpop.f32.mrf.mxu0
      %v1549 = vadd.f32 %v1086, %v1548
      %v1550 = vpop.f32.mrf.mxu0
      %v1551 = vadd.f32 %v1086, %v1550
      %1552 = vdwg.mxu0
      %1553 = vmatpush.bf16.msra.mxu0 %v1390
      %1554 = vmatpush.bf16.msra.mxu0 %v1389
      %1555 = vmatpush.bf16.msra.mxu0 %v1388
      %1556 = vmatpush.bf16.msra.mxu0 %v1387
      %1557 = vmatpush.bf16.msra.mxu0 %v1386
      %1558 = vmatpush.bf16.msra.mxu0 %v1385
      %1559 = vmatpush.bf16.msra.mxu0 %v1384
      %1560 = vmatpush.bf16.msra.mxu0 %v1383
      %1561 = vmatmul.bf16.gmra.mxu0 %v897
      %v1562 = vpop.f32.mrf.mxu0
      %v1563 = vadd.f32 %v1529, %v1562
      %v1564 = vpop.f32.mrf.mxu0
      %v1565 = vadd.f32 %v1531, %v1564
      %1566 = vmatmul.bf16.gmra.mxu0 %v906
      %v1567 = vpop.f32.mrf.mxu0
      %v1568 = vadd.f32 %v1534, %v1567
      %v1569 = vpop.f32.mrf.mxu0
      %v1570 = vadd.f32 %v1536, %v1569
      %1571 = vmatmul.bf16.gmra.mxu0 %v915
      %v1572 = vpop.f32.mrf.mxu0
      %v1573 = vadd.f32 %v1539, %v1572
      %v1574 = vpop.f32.mrf.mxu0
      %v1575 = vadd.f32 %v1541, %v1574
      %1576 = vmatmul.bf16.gmra.mxu0 %v924
      %v1577 = vpop.f32.mrf.mxu0
      %v1578 = vadd.f32 %v1544, %v1577
      %v1579 = vpop.f32.mrf.mxu0
      %v1580 = vadd.f32 %v1546, %v1579
      %1581 = vmatmul.bf16.gmra.mxu0 %v933
      %v1582 = vpop.f32.mrf.mxu0
      %v1583 = vadd.f32 %v1549, %v1582
      %v1584 = vpop.f32.mrf.mxu0
      %v1585 = vadd.f32 %v1551, %v1584
      %1586 = vdwg.mxu0
      %1587 = vmatpush.bf16.msra.mxu0 %v1398
      %1588 = vmatpush.bf16.msra.mxu0 %v1397
      %1589 = vmatpush.bf16.msra.mxu0 %v1396
      %1590 = vmatpush.bf16.msra.mxu0 %v1395
      %1591 = vmatpush.bf16.msra.mxu0 %v1394
      %1592 = vmatpush.bf16.msra.mxu0 %v1393
      %1593 = vmatpush.bf16.msra.mxu0 %v1392
      %1594 = vmatpush.bf16.msra.mxu0 %v1391
      %1595 = vmatmul.bf16.gmra.mxu0 %v898
      %v1596 = vpop.f32.mrf.mxu0
      %v1597 = vadd.f32 %v1563, %v1596
      %v1598 = vpop.f32.mrf.mxu0
      %v1599 = vadd.f32 %v1565, %v1598
      %1600 = vmatmul.bf16.gmra.mxu0 %v907
      %v1601 = vpop.f32.mrf.mxu0
      %v1602 = vadd.f32 %v1568, %v1601
      %v1603 = vpop.f32.mrf.mxu0
      %v1604 = vadd.f32 %v1570, %v1603
      %1605 = vmatmul.bf16.gmra.mxu0 %v916
      %v1606 = vpop.f32.mrf.mxu0
      %v1607 = vadd.f32 %v1573, %v1606
      %v1608 = vpop.f32.mrf.mxu0
      %v1609 = vadd.f32 %v1575, %v1608
      %1610 = vmatmul.bf16.gmra.mxu0 %v925
      %v1611 = vpop.f32.mrf.mxu0
      %v1612 = vadd.f32 %v1578, %v1611
      %v1613 = vpop.f32.mrf.mxu0
      %v1614 = vadd.f32 %v1580, %v1613
      %1615 = vmatmul.bf16.gmra.mxu0 %v934
      %v1616 = vpop.f32.mrf.mxu0
      %v1617 = vadd.f32 %v1583, %v1616
      %v1618 = vpop.f32.mrf.mxu0
      %v1619 = vadd.f32 %v1585, %v1618
      %1620 = vdwg.mxu0
      %1621 = vmatpush.bf16.msra.mxu0 %v1406
      %1622 = vmatpush.bf16.msra.mxu0 %v1405
      %1623 = vmatpush.bf16.msra.mxu0 %v1404
      %1624 = vmatpush.bf16.msra.mxu0 %v1403
      %1625 = vmatpush.bf16.msra.mxu0 %v1402
      %1626 = vmatpush.bf16.msra.mxu0 %v1401
      %1627 = vmatpush.bf16.msra.mxu0 %v1400
      %1628 = vmatpush.bf16.msra.mxu0 %v1399
      %1629 = vmatmul.bf16.gmra.mxu0 %v899
      %v1630 = vpop.f32.mrf.mxu0
      %v1631 = vadd.f32 %v1597, %v1630
      %v1632 = vpop.f32.mrf.mxu0
      %v1633 = vadd.f32 %v1599, %v1632
      %1634 = vmatmul.bf16.gmra.mxu0 %v908
      %v1635 = vpop.f32.mrf.mxu0
      %v1636 = vadd.f32 %v1602, %v1635
      %v1637 = vpop.f32.mrf.mxu0
      %v1638 = vadd.f32 %v1604, %v1637
      %1639 = vmatmul.bf16.gmra.mxu0 %v917
      %v1640 = vpop.f32.mrf.mxu0
      %v1641 = vadd.f32 %v1607, %v1640
      %v1642 = vpop.f32.mrf.mxu0
      %v1643 = vadd.f32 %v1609, %v1642
      %1644 = vmatmul.bf16.gmra.mxu0 %v926
      %v1645 = vpop.f32.mrf.mxu0
      %v1646 = vadd.f32 %v1612, %v1645
      %v1647 = vpop.f32.mrf.mxu0
      %v1648 = vadd.f32 %v1614, %v1647
      %1649 = vmatmul.bf16.gmra.mxu0 %v935
      %v1650 = vpop.f32.mrf.mxu0
      %v1651 = vadd.f32 %v1617, %v1650
      %v1652 = vpop.f32.mrf.mxu0
      %v1653 = vadd.f32 %v1619, %v1652
      %1654 = vdwg.mxu0
      %1655 = vmatpush.bf16.msra.mxu0 %v1414
      %1656 = vmatpush.bf16.msra.mxu0 %v1413
      %1657 = vmatpush.bf16.msra.mxu0 %v1412
      %1658 = vmatpush.bf16.msra.mxu0 %v1411
      %1659 = vmatpush.bf16.msra.mxu0 %v1410
      %1660 = vmatpush.bf16.msra.mxu0 %v1409
      %1661 = vmatpush.bf16.msra.mxu0 %v1408
      %1662 = vmatpush.bf16.msra.mxu0 %v1407
      %1663 = vmatmul.bf16.gmra.mxu0 %v900
      %v1664 = vpop.f32.mrf.mxu0
      %v1665 = vadd.f32 %v1631, %v1664
      %v1666 = vpop.f32.mrf.mxu0
      %v1667 = vadd.f32 %v1633, %v1666
      %1668 = vmatmul.bf16.gmra.mxu0 %v909
      %v1669 = vpop.f32.mrf.mxu0
      %v1670 = vadd.f32 %v1636, %v1669
      %v1671 = vpop.f32.mrf.mxu0
      %v1672 = vadd.f32 %v1638, %v1671
      %1673 = vmatmul.bf16.gmra.mxu0 %v918
      %v1674 = vpop.f32.mrf.mxu0
      %v1675 = vadd.f32 %v1641, %v1674
      %v1676 = vpop.f32.mrf.mxu0
      %v1677 = vadd.f32 %v1643, %v1676
      %1678 = vmatmul.bf16.gmra.mxu0 %v927
      %v1679 = vpop.f32.mrf.mxu0
      %v1680 = vadd.f32 %v1646, %v1679
      %v1681 = vpop.f32.mrf.mxu0
      %v1682 = vadd.f32 %v1648, %v1681
      %1683 = vmatmul.bf16.gmra.mxu0 %v936
      %v1684 = vpop.f32.mrf.mxu0
      %v1685 = vadd.f32 %v1651, %v1684
      %v1686 = vpop.f32.mrf.mxu0
      %v1687 = vadd.f32 %v1653, %v1686
      %1688 = vdwg.mxu0
      %1689 = vmatpush.bf16.msra.mxu0 %v1422
      %1690 = vmatpush.bf16.msra.mxu0 %v1421
      %1691 = vmatpush.bf16.msra.mxu0 %v1420
      %1692 = vmatpush.bf16.msra.mxu0 %v1419
      %1693 = vmatpush.bf16.msra.mxu0 %v1418
      %1694 = vmatpush.bf16.msra.mxu0 %v1417
      %1695 = vmatpush.bf16.msra.mxu0 %v1416
      %1696 = vmatpush.bf16.msra.mxu0 %v1415
      %1697 = vmatmul.bf16.gmra.mxu0 %v901
      %v1698 = vpop.f32.mrf.mxu0
      %v1699 = vadd.f32 %v1665, %v1698
      %v1700 = vpop.f32.mrf.mxu0
      %v1701 = vadd.f32 %v1667, %v1700
      %1702 = vmatmul.bf16.gmra.mxu0 %v910
      %v1703 = vpop.f32.mrf.mxu0
      %v1704 = vadd.f32 %v1670, %v1703
      %v1705 = vpop.f32.mrf.mxu0
      %v1706 = vadd.f32 %v1672, %v1705
      %1707 = vmatmul.bf16.gmra.mxu0 %v919
      %v1708 = vpop.f32.mrf.mxu0
      %v1709 = vadd.f32 %v1675, %v1708
      %v1710 = vpop.f32.mrf.mxu0
      %v1711 = vadd.f32 %v1677, %v1710
      %1712 = vmatmul.bf16.gmra.mxu0 %v928
      %v1713 = vpop.f32.mrf.mxu0
      %v1714 = vadd.f32 %v1680, %v1713
      %v1715 = vpop.f32.mrf.mxu0
      %v1716 = vadd.f32 %v1682, %v1715
      %1717 = vmatmul.bf16.gmra.mxu0 %v937
      %v1718 = vpop.f32.mrf.mxu0
      %v1719 = vadd.f32 %v1685, %v1718
      %v1720 = vpop.f32.mrf.mxu0
      %v1721 = vadd.f32 %v1687, %v1720
      %1722 = vdwg.mxu0
      %1723 = vmatpush.bf16.msra.mxu0 %v1430
      %1724 = vmatpush.bf16.msra.mxu0 %v1429
      %1725 = vmatpush.bf16.msra.mxu0 %v1428
      %1726 = vmatpush.bf16.msra.mxu0 %v1427
      %1727 = vmatpush.bf16.msra.mxu0 %v1426
      %1728 = vmatpush.bf16.msra.mxu0 %v1425
      %1729 = vmatpush.bf16.msra.mxu0 %v1424
      %1730 = vmatpush.bf16.msra.mxu0 %v1423
      %1731 = vmatmul.bf16.gmra.mxu0 %v902
      %v1732 = vpop.f32.mrf.mxu0
      %v1733 = vadd.f32 %v1699, %v1732
      %v1734 = vpop.f32.mrf.mxu0
      %v1735 = vadd.f32 %v1701, %v1734
      %1736 = vmatmul.bf16.gmra.mxu0 %v911
      %v1737 = vpop.f32.mrf.mxu0
      %v1738 = vadd.f32 %v1704, %v1737
      %v1739 = vpop.f32.mrf.mxu0
      %v1740 = vadd.f32 %v1706, %v1739
      %1741 = vmatmul.bf16.gmra.mxu0 %v920
      %v1742 = vpop.f32.mrf.mxu0
      %v1743 = vadd.f32 %v1709, %v1742
      %v1744 = vpop.f32.mrf.mxu0
      %v1745 = vadd.f32 %v1711, %v1744
      %1746 = vmatmul.bf16.gmra.mxu0 %v929
      %v1747 = vpop.f32.mrf.mxu0
      %v1748 = vadd.f32 %v1714, %v1747
      %v1749 = vpop.f32.mrf.mxu0
      %v1750 = vadd.f32 %v1716, %v1749
      %1751 = vmatmul.bf16.gmra.mxu0 %v938
      %v1752 = vpop.f32.mrf.mxu0
      %v1753 = vadd.f32 %v1719, %v1752
      %v1754 = vpop.f32.mrf.mxu0
      %v1755 = vadd.f32 %v1721, %v1754
      %1756 = vdwg.mxu0
      %1757 = vmatpush.bf16.msra.mxu0 %v1438
      %1758 = vmatpush.bf16.msra.mxu0 %v1437
      %1759 = vmatpush.bf16.msra.mxu0 %v1436
      %1760 = vmatpush.bf16.msra.mxu0 %v1435
      %1761 = vmatpush.bf16.msra.mxu0 %v1434
      %1762 = vmatpush.bf16.msra.mxu0 %v1433
      %1763 = vmatpush.bf16.msra.mxu0 %v1432
      %1764 = vmatpush.bf16.msra.mxu0 %v1431
      %1765 = vmatmul.bf16.gmra.mxu0 %v903
      %v1766 = vpop.f32.mrf.mxu0
      %v1767 = vadd.f32 %v1733, %v1766
      %v1768 = vpop.f32.mrf.mxu0
      %v1769 = vadd.f32 %v1735, %v1768
      %1770 = vmatmul.bf16.gmra.mxu0 %v912
      %v1771 = vpop.f32.mrf.mxu0
      %v1772 = vadd.f32 %v1738, %v1771
      %v1773 = vpop.f32.mrf.mxu0
      %v1774 = vadd.f32 %v1740, %v1773
      %1775 = vmatmul.bf16.gmra.mxu0 %v921
      %v1776 = vpop.f32.mrf.mxu0
      %v1777 = vadd.f32 %v1743, %v1776
      %v1778 = vpop.f32.mrf.mxu0
      %v1779 = vadd.f32 %v1745, %v1778
      %1780 = vmatmul.bf16.gmra.mxu0 %v930
      %v1781 = vpop.f32.mrf.mxu0
      %v1782 = vadd.f32 %v1748, %v1781
      %v1783 = vpop.f32.mrf.mxu0
      %v1784 = vadd.f32 %v1750, %v1783
      %1785 = vmatmul.bf16.gmra.mxu0 %v939
      %v1786 = vpop.f32.mrf.mxu0
      %v1787 = vadd.f32 %v1753, %v1786
      %v1788 = vpop.f32.mrf.mxu0
      %v1789 = vadd.f32 %v1755, %v1788
      %1790 = vdwg.mxu0
      %1791 = vmatpush.bf16.msra.mxu0 %v1446
      %1792 = vmatpush.bf16.msra.mxu0 %v1445
      %1793 = vmatpush.bf16.msra.mxu0 %v1444
      %1794 = vmatpush.bf16.msra.mxu0 %v1443
      %1795 = vmatpush.bf16.msra.mxu0 %v1442
      %1796 = vmatpush.bf16.msra.mxu0 %v1441
      %1797 = vmatpush.bf16.msra.mxu0 %v1440
      %1798 = vmatpush.bf16.msra.mxu0 %v1439
      %1799 = vmatmul.bf16.gmra.mxu0 %v904
      %v1800 = vpop.f32.mrf.mxu0
      %v1801 = vadd.f32 %v1767, %v1800
      %v1802 = vpop.f32.mrf.mxu0
      %v1803 = vadd.f32 %v1769, %v1802
      %1804 = vmatmul.bf16.gmra.mxu0 %v913
      %v1805 = vpop.f32.mrf.mxu0
      %v1806 = vadd.f32 %v1772, %v1805
      %v1807 = vpop.f32.mrf.mxu0
      %v1808 = vadd.f32 %v1774, %v1807
      %1809 = vmatmul.bf16.gmra.mxu0 %v922
      %v1810 = vpop.f32.mrf.mxu0
      %v1811 = vadd.f32 %v1777, %v1810
      %v1812 = vpop.f32.mrf.mxu0
      %v1813 = vadd.f32 %v1779, %v1812
      %1814 = vmatmul.bf16.gmra.mxu0 %v931
      %v1815 = vpop.f32.mrf.mxu0
      %v1816 = vadd.f32 %v1782, %v1815
      %v1817 = vpop.f32.mrf.mxu0
      %v1818 = vadd.f32 %v1784, %v1817
      %1819 = vmatmul.bf16.gmra.mxu0 %v940
      %v1820 = vpop.f32.mrf.mxu0
      %v1821 = vadd.f32 %v1787, %v1820
      %v1822 = vpop.f32.mrf.mxu0
      %v1823 = vadd.f32 %v1789, %v1822
      %1824 = vdwg.mxu0
      %v1825 = vmax.f32 %v1801, 0.0
      %v1826 = vmax.f32 %v1803, 0.0
      %v1827 = vmax.f32 %v1806, 0.0
      %v1828 = vmax.f32 %v1808, 0.0
      %v1829 = vmax.f32 %v1811, 0.0
      %v1830 = vmax.f32 %v1813, 0.0
      %v1831 = vmax.f32 %v1816, 0.0
      %v1832 = vmax.f32 %v1818, 0.0
      %v1833 = vmax.f32 %v1821, 0.0
      %v1834 = vmax.f32 %v1823, 0.0
      %v1835 = vmul.f32 %v1825, %v757
      %v1836 = vmul.f32 %v1826, %v762
      %v1837 = vmul.f32 %v1827, %v767
      %v1838 = vmul.f32 %v1828, %v772
      %v1839 = vmul.f32 %v1829, %v777
      %v1840 = vmul.f32 %v1830, %v782
      %v1841 = vmul.f32 %v1831, %v787
      %v1842 = vmul.f32 %v1832, %v792
      %v1843 = vmul.f32 %v1833, %v797
      %v1844 = vmul.f32 %v1834, %v802
      %1845 = vst [vmem:[#allocation3 + $0xb] sm:$0xff] %v1835
      %1846 = vst [vmem:[#allocation3 + $0x13] sm:$0xff] %v1836
      %1847 = vst [vmem:[#allocation3 + $0x1b] sm:$0xff] %v1837
      %1848 = vst [vmem:[#allocation3 + $0x23] sm:$0xff] %v1838
      %1849 = vst [vmem:[#allocation3 + $0x2b] sm:$0xff] %v1839
      %1850 = vst [vmem:[#allocation3 + $0x33] sm:$0xff] %v1840
      %1851 = vst [vmem:[#allocation3 + $0x3b] sm:$0xff] %v1841
      %1852 = vst [vmem:[#allocation3 + $0x43] sm:$0xff] %v1842
      %1853 = vst [vmem:[#allocation3 + $0x4b] sm:$0xff] %v1843
      %1854 = vst [vmem:[#allocation3 + $0x53] sm:$0xff] %v1844
      %v1855 = vld [vmem:[#allocation3] sm:$0xff]
      %v1856 = vld [vmem:[#allocation3 + $0x8] sm:$0xff]
      %v1857 = vld [vmem:[#allocation3 + $0x10] sm:$0xff]
      %v1858 = vld [vmem:[#allocation3 + $0x18] sm:$0xff]
      %v1859 = vld [vmem:[#allocation3 + $0x20] sm:$0xff]
      %v1860 = vld [vmem:[#allocation3 + $0x28] sm:$0xff]
      %v1861 = vld [vmem:[#allocation3 + $0x30] sm:$0xff]
      %v1862 = vld [vmem:[#allocation3 + $0x38] sm:$0xff]
      %v1863 = vld [vmem:[#allocation3 + $0x40] sm:$0xff]
      %v1864 = vld [vmem:[#allocation3 + $0x48] sm:$0xff]
      %v1865 = vld [vmem:[#allocation3 + $0x1] sm:$0xff]
      %v1866 = vld [vmem:[#allocation3 + $0x9] sm:$0xff]
      %v1867 = vld [vmem:[#allocation3 + $0x11] sm:$0xff]
      %v1868 = vld [vmem:[#allocation3 + $0x19] sm:$0xff]
      %v1869 = vld [vmem:[#allocation3 + $0x21] sm:$0xff]
      %v1870 = vld [vmem:[#allocation3 + $0x29] sm:$0xff]
      %v1871 = vld [vmem:[#allocation3 + $0x31] sm:$0xff]
      %v1872 = vld [vmem:[#allocation3 + $0x39] sm:$0xff]
      %v1873 = vld [vmem:[#allocation3 + $0x41] sm:$0xff]
      %v1874 = vld [vmem:[#allocation3 + $0x49] sm:$0xff]
      %v1875 = vld [vmem:[#allocation3 + $0x2] sm:$0xff]
      %v1876 = vld [vmem:[#allocation3 + $0xa] sm:$0xff]
      %v1877 = vld [vmem:[#allocation3 + $0x12] sm:$0xff]
      %v1878 = vld [vmem:[#allocation3 + $0x1a] sm:$0xff]
      %v1879 = vld [vmem:[#allocation3 + $0x22] sm:$0xff]
      %v1880 = vld [vmem:[#allocation3 + $0x2a] sm:$0xff]
      %v1881 = vld [vmem:[#allocation3 + $0x32] sm:$0xff]
      %v1882 = vld [vmem:[#allocation3 + $0x3a] sm:$0xff]
      %v1883 = vld [vmem:[#allocation3 + $0x42] sm:$0xff]
      %v1884 = vld [vmem:[#allocation3 + $0x4a] sm:$0xff]
      %v1885 = vld [vmem:[#allocation3 + $0x52] sm:$0xff]
      %v1886 = vld [vmem:[#allocation3 + $0xb] sm:$0xff]
      %v1887 = vld [vmem:[#allocation3 + $0x13] sm:$0xff]
      %v1888 = vld [vmem:[#allocation3 + $0x1b] sm:$0xff]
      %v1889 = vld [vmem:[#allocation3 + $0x23] sm:$0xff]
      %v1890 = vld [vmem:[#allocation3 + $0x2b] sm:$0xff]
      %v1891 = vld [vmem:[#allocation3 + $0x33] sm:$0xff]
      %v1892 = vld [vmem:[#allocation3 + $0x3b] sm:$0xff]
      %v1893 = vld [vmem:[#allocation3 + $0x43] sm:$0xff]
      %v1894 = vld [vmem:[#allocation3 + $0x4b] sm:$0xff]
      %v1895 = vld [vmem:[#allocation3 + $0x53] sm:$0xff]
      %v1896 = vld [vmem:[#allocation3 + $0xc] sm:$0xff]
      %v1897 = vld [vmem:[#allocation3 + $0x14] sm:$0xff]
      %v1898 = vld [vmem:[#allocation3 + $0x1c] sm:$0xff]
      %v1899 = vld [vmem:[#allocation3 + $0x24] sm:$0xff]
      %v1900 = vld [vmem:[#allocation3 + $0x2c] sm:$0xff]
      %v1901 = vld [vmem:[#allocation3 + $0x34] sm:$0xff]
      %v1902 = vld [vmem:[#allocation3 + $0x3c] sm:$0xff]
      %v1903 = vld [vmem:[#allocation3 + $0x44] sm:$0xff]
      %v1904 = vld [vmem:[#allocation3 + $0x4c] sm:$0xff]
      %v1905 = vld [vmem:[#allocation3 + $0x54] sm:$0xff]
      %v1906 = vld [vmem:[#allocation3 + $0x5c] sm:$0xff]
      %v1907 = vld [vmem:[#allocation3 + $0x15] sm:$0xff]
      %v1908 = vld [vmem:[#allocation3 + $0x1d] sm:$0xff]
      %v1909 = vld [vmem:[#allocation3 + $0x25] sm:$0xff]
      %v1910 = vld [vmem:[#allocation3 + $0x2d] sm:$0xff]
      %v1911 = vld [vmem:[#allocation3 + $0x35] sm:$0xff]
      %v1912 = vld [vmem:[#allocation3 + $0x3d] sm:$0xff]
      %v1913 = vld [vmem:[#allocation3 + $0x45] sm:$0xff]
      %v1914 = vld [vmem:[#allocation3 + $0x4d] sm:$0xff]
      %v1915 = vld [vmem:[#allocation3 + $0x55] sm:$0xff]
      %v1916 = vld [vmem:[#allocation3 + $0x5d] sm:$0xff]
      %v1917 = vld [vmem:[#allocation3 + $0x16] sm:$0xff]
      %v1918 = vld [vmem:[#allocation3 + $0x1e] sm:$0xff]
      %v1919 = vld [vmem:[#allocation3 + $0x26] sm:$0xff]
      %v1920 = vld [vmem:[#allocation3 + $0x2e] sm:$0xff]
      %v1921 = vld [vmem:[#allocation3 + $0x36] sm:$0xff]
      %v1922 = vld [vmem:[#allocation3 + $0x3e] sm:$0xff]
      %v1923 = vld [vmem:[#allocation3 + $0x46] sm:$0xff]
      %v1924 = vld [vmem:[#allocation3 + $0x4e] sm:$0xff]
      %v1925 = vld [vmem:[#allocation3 + $0x56] sm:$0xff]
      %v1926 = vld [vmem:[#allocation3 + $0x5e] sm:$0xff]
      %v1927 = vpack.c.bf16 %v1856, %v1855
      %v1928 = vpack.c.bf16 %v1866, %v1865
      %v1929 = vpack.c.bf16 %v1876, %v1875
      %v1930 = vpack.c.bf16 %v1877, %v1876
      %v1931 = vpack.c.bf16 %v1887, %v1886
      %v1932 = vpack.c.bf16 %v1897, %v1896
      %v1933 = vpack.c.bf16 %v1898, %v1897
      %v1934 = vpack.c.bf16 %v1908, %v1907
      %v1935 = vpack.c.bf16 %v1918, %v1917
      %v1936 = vpack.c.bf16 %v1858, %v1857
      %v1937 = vpack.c.bf16 %v1868, %v1867
      %v1938 = vpack.c.bf16 %v1878, %v1877
      %v1939 = vpack.c.bf16 %v1879, %v1878
      %v1940 = vpack.c.bf16 %v1889, %v1888
      %v1941 = vpack.c.bf16 %v1899, %v1898
      %v1942 = vpack.c.bf16 %v1900, %v1899
      %v1943 = vpack.c.bf16 %v1910, %v1909
      %v1944 = vpack.c.bf16 %v1920, %v1919
      %v1945 = vpack.c.bf16 %v1860, %v1859
      %v1946 = vpack.c.bf16 %v1870, %v1869
      %v1947 = vpack.c.bf16 %v1880, %v1879
      %v1948 = vpack.c.bf16 %v1881, %v1880
      %v1949 = vpack.c.bf16 %v1891, %v1890
      %v1950 = vpack.c.bf16 %v1901, %v1900
      %v1951 = vpack.c.bf16 %v1902, %v1901
      %v1952 = vpack.c.bf16 %v1912, %v1911
      %v1953 = vpack.c.bf16 %v1922, %v1921
      %v1954 = vpack.c.bf16 %v1862, %v1861
      %v1955 = vpack.c.bf16 %v1872, %v1871
      %v1956 = vpack.c.bf16 %v1882, %v1881
      %v1957 = vpack.c.bf16 %v1883, %v1882
      %v1958 = vpack.c.bf16 %v1893, %v1892
      %v1959 = vpack.c.bf16 %v1903, %v1902
      %v1960 = vpack.c.bf16 %v1904, %v1903
      %v1961 = vpack.c.bf16 %v1914, %v1913
      %v1962 = vpack.c.bf16 %v1924, %v1923
      %v1963 = vpack.c.bf16 %v1864, %v1863
      %v1964 = vpack.c.bf16 %v1874, %v1873
      %v1965 = vpack.c.bf16 %v1884, %v1883
      %v1966 = vpack.c.bf16 %v1885, %v1884
      %v1967 = vpack.c.bf16 %v1895, %v1894
      %v1968 = vpack.c.bf16 %v1905, %v1904
      %v1969 = vpack.c.bf16 %v1906, %v1905
      %v1970 = vpack.c.bf16 %v1916, %v1915
      %v1971 = vpack.c.bf16 %v1926, %v1925
      %v1972 = vld [vmem:[%s3] sm:$0xf]
      %v1973 = vld [vmem:[%s3 + $0x4] sm:$0xf]
      %v1974 = vld [vmem:[%s3 + $0x8] sm:$0xf]
      %v1975 = vld [vmem:[%s3 + $0xc] sm:$0xf]
      %v1976 = vld [vmem:[%s3 + $0x10] sm:$0xf]
      %v1977 = vld [vmem:[%s3 + $0x14] sm:$0xf]
      %v1978 = vld [vmem:[%s3 + $0x18] sm:$0xf]
      %v1979 = vld [vmem:[%s3 + $0x1c] sm:$0xf]
      %v1980 = vld [vmem:[%s3 + $0x20] sm:$0xf]
      %v1981 = vld [vmem:[%s3 + $0x24] sm:$0xf]
      %v1982 = vld [vmem:[%s3 + $0x28] sm:$0xf]
      %v1983 = vld [vmem:[%s3 + $0x2c] sm:$0xf]
      %v1984 = vld [vmem:[%s3 + $0x30] sm:$0xf]
      %v1985 = vld [vmem:[%s3 + $0x34] sm:$0xf]
      %v1986 = vld [vmem:[%s3 + $0x38] sm:$0xf]
      %v1987 = vld [vmem:[%s3 + $0x3c] sm:$0xf]
      %v1988 = vld [vmem:[%s3 + $0x40] sm:$0xf]
      %v1989 = vld [vmem:[%s3 + $0x44] sm:$0xf]
      %v1990 = vld [vmem:[%s3 + $0x48] sm:$0xf]
      %v1991 = vld [vmem:[%s3 + $0x4c] sm:$0xf]
      %v1992 = vld [vmem:[%s3 + $0x50] sm:$0xf]
      %v1993 = vld [vmem:[%s3 + $0x54] sm:$0xf]
      %v1994 = vld [vmem:[%s3 + $0x58] sm:$0xf]
      %v1995 = vld [vmem:[%s3 + $0x5c] sm:$0xf]
      %v1996 = vld [vmem:[%s3 + $0x60] sm:$0xf]
      %v1997 = vld [vmem:[%s3 + $0x64] sm:$0xf]
      %v1998 = vld [vmem:[%s3 + $0x68] sm:$0xf]
      %v1999 = vld [vmem:[%s3 + $0x6c] sm:$0xf]
      %v2000 = vld [vmem:[%s3 + $0x70] sm:$0xf]
      %v2001 = vld [vmem:[%s3 + $0x74] sm:$0xf]
      %v2002 = vld [vmem:[%s3 + $0x78] sm:$0xf]
      %v2003 = vld [vmem:[%s3 + $0x7c] sm:$0xf]
      %v2004 = vld [vmem:[%s3 + $0x80] sm:$0xf]
      %v2005 = vld [vmem:[%s3 + $0x84] sm:$0xf]
      %v2006 = vld [vmem:[%s3 + $0x88] sm:$0xf]
      %v2007 = vld [vmem:[%s3 + $0x8c] sm:$0xf]
      %v2008 = vld [vmem:[%s3 + $0x90] sm:$0xf]
      %v2009 = vld [vmem:[%s3 + $0x94] sm:$0xf]
      %v2010 = vld [vmem:[%s3 + $0x98] sm:$0xf]
      %v2011 = vld [vmem:[%s3 + $0x9c] sm:$0xf]
      %v2012 = vld [vmem:[%s3 + $0xa0] sm:$0xf]
      %v2013 = vld [vmem:[%s3 + $0xa4] sm:$0xf]
      %v2014 = vld [vmem:[%s3 + $0xa8] sm:$0xf]
      %v2015 = vld [vmem:[%s3 + $0xac] sm:$0xf]
      %v2016 = vld [vmem:[%s3 + $0xb0] sm:$0xf]
      %v2017 = vld [vmem:[%s3 + $0xb4] sm:$0xf]
      %v2018 = vld [vmem:[%s3 + $0xb8] sm:$0xf]
      %v2019 = vld [vmem:[%s3 + $0xbc] sm:$0xf]
      %v2020 = vld [vmem:[%s3 + $0xc0] sm:$0xf]
      %v2021 = vld [vmem:[%s3 + $0xc4] sm:$0xf]
      %v2022 = vld [vmem:[%s3 + $0xc8] sm:$0xf]
      %v2023 = vld [vmem:[%s3 + $0xcc] sm:$0xf]
      %v2024 = vld [vmem:[%s3 + $0xd0] sm:$0xf]
      %v2025 = vld [vmem:[%s3 + $0xd4] sm:$0xf]
      %v2026 = vld [vmem:[%s3 + $0xd8] sm:$0xf]
      %v2027 = vld [vmem:[%s3 + $0xdc] sm:$0xf]
      %v2028 = vld [vmem:[%s3 + $0xe0] sm:$0xf]
      %v2029 = vld [vmem:[%s3 + $0xe4] sm:$0xf]
      %v2030 = vld [vmem:[%s3 + $0xe8] sm:$0xf]
      %v2031 = vld [vmem:[%s3 + $0xec] sm:$0xf]
      %v2032 = vld [vmem:[%s3 + $0xf0] sm:$0xf]
      %v2033 = vld [vmem:[%s3 + $0xf4] sm:$0xf]
      %v2034 = vld [vmem:[%s3 + $0xf8] sm:$0xf]
      %v2035 = vld [vmem:[%s3 + $0xfc] sm:$0xf]
      %v2036 = vld [vmem:[%s3 + $0x100] sm:$0xf]
      %v2037 = vld [vmem:[%s3 + $0x104] sm:$0xf]
      %v2038 = vld [vmem:[%s3 + $0x108] sm:$0xf]
      %v2039 = vld [vmem:[%s3 + $0x10c] sm:$0xf]
      %v2040 = vld [vmem:[%s3 + $0x110] sm:$0xf]
      %v2041 = vld [vmem:[%s3 + $0x114] sm:$0xf]
      %v2042 = vld [vmem:[%s3 + $0x118] sm:$0xf]
      %v2043 = vld [vmem:[%s3 + $0x11c] sm:$0xf]
      %v2044 = vld [vmem:[%s3 + $0x120] sm:$0xf]
      %v2045 = vld [vmem:[%s3 + $0x124] sm:$0xf]
      %v2046 = vld [vmem:[%s3 + $0x128] sm:$0xf]
      %v2047 = vld [vmem:[%s3 + $0x12c] sm:$0xf]
      %v2048 = vld [vmem:[%s3 + $0x130] sm:$0xf]
      %v2049 = vld [vmem:[%s3 + $0x134] sm:$0xf]
      %v2050 = vld [vmem:[%s3 + $0x138] sm:$0xf]
      %v2051 = vld [vmem:[%s3 + $0x13c] sm:$0xf]
      %v2052 = vld [vmem:[%s3 + $0x140] sm:$0xf]
      %v2053 = vld [vmem:[%s3 + $0x144] sm:$0xf]
      %v2054 = vld [vmem:[%s3 + $0x148] sm:$0xf]
      %v2055 = vld [vmem:[%s3 + $0x14c] sm:$0xf]
      %v2056 = vld [vmem:[%s3 + $0x150] sm:$0xf]
      %v2057 = vld [vmem:[%s3 + $0x154] sm:$0xf]
      %v2058 = vld [vmem:[%s3 + $0x158] sm:$0xf]
      %v2059 = vld [vmem:[%s3 + $0x15c] sm:$0xf]
      %v2060 = vld [vmem:[%s3 + $0x160] sm:$0xf]
      %v2061 = vld [vmem:[%s3 + $0x164] sm:$0xf]
      %v2062 = vld [vmem:[%s3 + $0x168] sm:$0xf]
      %v2063 = vld [vmem:[%s3 + $0x16c] sm:$0xf]
      %v2064 = vld [vmem:[%s3 + $0x170] sm:$0xf]
      %v2065 = vld [vmem:[%s3 + $0x174] sm:$0xf]
      %v2066 = vld [vmem:[%s3 + $0x178] sm:$0xf]
      %v2067 = vld [vmem:[%s3 + $0x17c] sm:$0xf]
      %v2068 = vld [vmem:[%s3 + $0x180] sm:$0xf]
      %v2069 = vld [vmem:[%s3 + $0x184] sm:$0xf]
      %v2070 = vld [vmem:[%s3 + $0x188] sm:$0xf]
      %v2071 = vld [vmem:[%s3 + $0x18c] sm:$0xf]
      %v2072 = vld [vmem:[%s3 + $0x190] sm:$0xf]
      %v2073 = vld [vmem:[%s3 + $0x194] sm:$0xf]
      %v2074 = vld [vmem:[%s3 + $0x198] sm:$0xf]
      %v2075 = vld [vmem:[%s3 + $0x19c] sm:$0xf]
      %v2076 = vld [vmem:[%s3 + $0x1a0] sm:$0xf]
      %v2077 = vld [vmem:[%s3 + $0x1a4] sm:$0xf]
      %v2078 = vld [vmem:[%s3 + $0x1a8] sm:$0xf]
      %v2079 = vld [vmem:[%s3 + $0x1ac] sm:$0xf]
      %v2080 = vld [vmem:[%s3 + $0x1b0] sm:$0xf]
      %v2081 = vld [vmem:[%s3 + $0x1b4] sm:$0xf]
      %v2082 = vld [vmem:[%s3 + $0x1b8] sm:$0xf]
      %v2083 = vld [vmem:[%s3 + $0x1bc] sm:$0xf]
      %v2084 = vld [vmem:[%s3 + $0x1c0] sm:$0xf]
      %v2085 = vld [vmem:[%s3 + $0x1c4] sm:$0xf]
      %v2086 = vld [vmem:[%s3 + $0x1c8] sm:$0xf]
      %v2087 = vld [vmem:[%s3 + $0x1cc] sm:$0xf]
      %v2088 = vld [vmem:[%s3 + $0x1d0] sm:$0xf]
      %v2089 = vld [vmem:[%s3 + $0x1d4] sm:$0xf]
      %v2090 = vld [vmem:[%s3 + $0x1d8] sm:$0xf]
      %v2091 = vld [vmem:[%s3 + $0x1dc] sm:$0xf]
      %v2092 = vld [vmem:[%s3 + $0x1e0] sm:$0xf]
      %v2093 = vld [vmem:[%s3 + $0x1e4] sm:$0xf]
      %v2094 = vld [vmem:[%s3 + $0x1e8] sm:$0xf]
      %v2095 = vld [vmem:[%s3 + $0x1ec] sm:$0xf]
      %v2096 = vld [vmem:[%s3 + $0x1f0] sm:$0xf]
      %v2097 = vld [vmem:[%s3 + $0x1f4] sm:$0xf]
      %v2098 = vld [vmem:[%s3 + $0x1f8] sm:$0xf]
      %v2099 = vld [vmem:[%s3 + $0x1fc] sm:$0xf]
      %v2100 = vld [vmem:[%s3 + $0x200] sm:$0xf]
      %v2101 = vld [vmem:[%s3 + $0x204] sm:$0xf]
      %v2102 = vld [vmem:[%s3 + $0x208] sm:$0xf]
      %v2103 = vld [vmem:[%s3 + $0x20c] sm:$0xf]
      %v2104 = vld [vmem:[%s3 + $0x210] sm:$0xf]
      %v2105 = vld [vmem:[%s3 + $0x214] sm:$0xf]
      %v2106 = vld [vmem:[%s3 + $0x218] sm:$0xf]
      %v2107 = vld [vmem:[%s3 + $0x21c] sm:$0xf]
      %v2108 = vld [vmem:[%s3 + $0x220] sm:$0xf]
      %v2109 = vld [vmem:[%s3 + $0x224] sm:$0xf]
      %v2110 = vld [vmem:[%s3 + $0x228] sm:$0xf]
      %v2111 = vld [vmem:[%s3 + $0x22c] sm:$0xf]
      %v2112 = vld [vmem:[%s3 + $0x230] sm:$0xf]
      %v2113 = vld [vmem:[%s3 + $0x234] sm:$0xf]
      %v2114 = vld [vmem:[%s3 + $0x238] sm:$0xf]
      %v2115 = vld [vmem:[%s3 + $0x23c] sm:$0xf]
      %v2116 = vld [vmem:[%s4 + $0x2] sm:$0x1]
      %v2117 = vperm.slane %v2116, 0
      %v2262 = vunpack.c.l.b16 %v1972
      %v2263 = vunpack.c.l.b16 %v1973
      %v2264 = vunpack.c.l.b16 %v1974
      %v2265 = vunpack.c.l.b16 %v1975
      %v2266 = vunpack.c.l.b16 %v1976
      %v2267 = vunpack.c.l.b16 %v1977
      %v2268 = vunpack.c.l.b16 %v1978
      %v2269 = vunpack.c.l.b16 %v1979
      %v2270 = vunpack.c.l.b16 %v1980
      %v2271 = vunpack.c.l.b16 %v1981
      %v2272 = vunpack.c.l.b16 %v1982
      %v2273 = vunpack.c.l.b16 %v1983
      %v2274 = vunpack.c.l.b16 %v1984
      %v2275 = vunpack.c.l.b16 %v1985
      %v2276 = vunpack.c.l.b16 %v1986
      %v2277 = vunpack.c.l.b16 %v1987
      %v2278 = vunpack.c.l.b16 %v1988
      %v2279 = vunpack.c.l.b16 %v1989
      %v2280 = vunpack.c.l.b16 %v1990
      %v2281 = vunpack.c.l.b16 %v1991
      %v2282 = vunpack.c.l.b16 %v1992
      %v2283 = vunpack.c.l.b16 %v1993
      %v2284 = vunpack.c.l.b16 %v1994
      %v2285 = vunpack.c.l.b16 %v1995
      %v2286 = vunpack.c.l.b16 %v1996
      %v2287 = vunpack.c.l.b16 %v1997
      %v2288 = vunpack.c.l.b16 %v1998
      %v2289 = vunpack.c.l.b16 %v1999
      %v2290 = vunpack.c.l.b16 %v2000
      %v2291 = vunpack.c.l.b16 %v2001
      %v2292 = vunpack.c.l.b16 %v2002
      %v2293 = vunpack.c.l.b16 %v2003
      %v2294 = vunpack.c.l.b16 %v2004
      %v2295 = vunpack.c.l.b16 %v2005
      %v2296 = vunpack.c.l.b16 %v2006
      %v2297 = vunpack.c.l.b16 %v2007
      %v2298 = vunpack.c.l.b16 %v2008
      %v2299 = vunpack.c.l.b16 %v2009
      %v2300 = vunpack.c.l.b16 %v2010
      %v2301 = vunpack.c.l.b16 %v2011
      %v2302 = vunpack.c.l.b16 %v2012
      %v2303 = vunpack.c.l.b16 %v2013
      %v2304 = vunpack.c.l.b16 %v2014
      %v2305 = vunpack.c.l.b16 %v2015
      %v2306 = vunpack.c.l.b16 %v2016
      %v2307 = vunpack.c.l.b16 %v2017
      %v2308 = vunpack.c.l.b16 %v2018
      %v2309 = vunpack.c.l.b16 %v2019
      %v2310 = vunpack.c.l.b16 %v2020
      %v2311 = vunpack.c.l.b16 %v2021
      %v2312 = vunpack.c.l.b16 %v2022
      %v2313 = vunpack.c.l.b16 %v2023
      %v2314 = vunpack.c.l.b16 %v2024
      %v2315 = vunpack.c.l.b16 %v2025
      %v2316 = vunpack.c.l.b16 %v2026
      %v2317 = vunpack.c.l.b16 %v2027
      %v2318 = vunpack.c.l.b16 %v2028
      %v2319 = vunpack.c.l.b16 %v2029
      %v2320 = vunpack.c.l.b16 %v2030
      %v2321 = vunpack.c.l.b16 %v2031
      %v2322 = vunpack.c.l.b16 %v2032
      %v2323 = vunpack.c.l.b16 %v2033
      %v2324 = vunpack.c.l.b16 %v2034
      %v2325 = vunpack.c.l.b16 %v2035
      %v2326 = vunpack.c.l.b16 %v2036
      %v2327 = vunpack.c.l.b16 %v2037
      %v2328 = vunpack.c.l.b16 %v2038
      %v2329 = vunpack.c.l.b16 %v2039
      %v2330 = vunpack.c.l.b16 %v2040
      %v2331 = vunpack.c.l.b16 %v2041
      %v2332 = vunpack.c.l.b16 %v2042
      %v2333 = vunpack.c.l.b16 %v2043
      %v2334 = vunpack.c.l.b16 %v2044
      %v2335 = vunpack.c.l.b16 %v2045
      %v2336 = vunpack.c.l.b16 %v2046
      %v2337 = vunpack.c.l.b16 %v2047
      %v2338 = vunpack.c.l.b16 %v2048
      %v2339 = vunpack.c.l.b16 %v2049
      %v2340 = vunpack.c.l.b16 %v2050
      %v2341 = vunpack.c.l.b16 %v2051
      %v2342 = vunpack.c.l.b16 %v2052
      %v2343 = vunpack.c.l.b16 %v2053
      %v2344 = vunpack.c.l.b16 %v2054
      %v2345 = vunpack.c.l.b16 %v2055
      %v2346 = vunpack.c.l.b16 %v2056
      %v2347 = vunpack.c.l.b16 %v2057
      %v2348 = vunpack.c.l.b16 %v2058
      %v2349 = vunpack.c.l.b16 %v2059
      %v2350 = vunpack.c.l.b16 %v2060
      %v2351 = vunpack.c.l.b16 %v2061
      %v2352 = vunpack.c.l.b16 %v2062
      %v2353 = vunpack.c.l.b16 %v2063
      %v2354 = vunpack.c.l.b16 %v2064
      %v2355 = vunpack.c.l.b16 %v2065
      %v2356 = vunpack.c.l.b16 %v2066
      %v2357 = vunpack.c.l.b16 %v2067
      %v2358 = vunpack.c.l.b16 %v2068
      %v2359 = vunpack.c.l.b16 %v2069
      %v2360 = vunpack.c.l.b16 %v2070
      %v2361 = vunpack.c.l.b16 %v2071
      %v2362 = vunpack.c.l.b16 %v2072
      %v2363 = vunpack.c.l.b16 %v2073
      %v2364 = vunpack.c.l.b16 %v2074
      %v2365 = vunpack.c.l.b16 %v2075
      %v2366 = vunpack.c.l.b16 %v2076
      %v2367 = vunpack.c.l.b16 %v2077
      %v2368 = vunpack.c.l.b16 %v2078
      %v2369 = vunpack.c.l.b16 %v2079
      %v2370 = vunpack.c.l.b16 %v2080
      %v2371 = vunpack.c.l.b16 %v2081
      %v2372 = vunpack.c.l.b16 %v2082
      %v2373 = vunpack.c.l.b16 %v2083
      %v2374 = vunpack.c.l.b16 %v2084
      %v2375 = vunpack.c.l.b16 %v2085
      %v2376 = vunpack.c.l.b16 %v2086
      %v2377 = vunpack.c.l.b16 %v2087
      %v2378 = vunpack.c.l.b16 %v2088
      %v2379 = vunpack.c.l.b16 %v2089
      %v2380 = vunpack.c.l.b16 %v2090
      %v2381 = vunpack.c.l.b16 %v2091
      %v2382 = vunpack.c.l.b16 %v2092
      %v2383 = vunpack.c.l.b16 %v2093
      %v2384 = vunpack.c.l.b16 %v2094
      %v2385 = vunpack.c.l.b16 %v2095
      %v2386 = vunpack.c.l.b16 %v2096
      %v2387 = vunpack.c.l.b16 %v2097
      %v2388 = vunpack.c.l.b16 %v2098
      %v2389 = vunpack.c.l.b16 %v2099
      %v2390 = vunpack.c.l.b16 %v2100
      %v2391 = vunpack.c.l.b16 %v2101
      %v2392 = vunpack.c.l.b16 %v2102
      %v2393 = vunpack.c.l.b16 %v2103
      %v2394 = vunpack.c.l.b16 %v2104
      %v2395 = vunpack.c.l.b16 %v2105
      %v2396 = vunpack.c.l.b16 %v2106
      %v2397 = vunpack.c.l.b16 %v2107
      %v2398 = vunpack.c.l.b16 %v2108
      %v2399 = vunpack.c.l.b16 %v2109
      %v2400 = vunpack.c.l.b16 %v2110
      %v2401 = vunpack.c.l.b16 %v2111
      %v2402 = vunpack.c.l.b16 %v2112
      %v2403 = vunpack.c.l.b16 %v2113
      %v2404 = vunpack.c.l.b16 %v2114
      %v2405 = vunpack.c.l.b16 %v2115
      %v2406 = vpack.c.b16 %v2263, %v2262
      %v2407 = vpack.c.b16 %v2265, %v2264
      %v2408 = vpack.c.b16 %v2267, %v2266
      %v2409 = vpack.c.b16 %v2269, %v2268
      %v2410 = vpack.c.b16 %v2271, %v2270
      %v2411 = vpack.c.b16 %v2273, %v2272
      %v2412 = vpack.c.b16 %v2275, %v2274
      %v2413 = vpack.c.b16 %v2277, %v2276
      %v2414 = vpack.c.b16 %v2279, %v2278
      %v2415 = vpack.c.b16 %v2281, %v2280
      %v2416 = vpack.c.b16 %v2283, %v2282
      %v2417 = vpack.c.b16 %v2285, %v2284
      %v2418 = vpack.c.b16 %v2287, %v2286
      %v2419 = vpack.c.b16 %v2289, %v2288
      %v2420 = vpack.c.b16 %v2291, %v2290
      %v2421 = vpack.c.b16 %v2293, %v2292
      %v2422 = vpack.c.b16 %v2295, %v2294
      %v2423 = vpack.c.b16 %v2297, %v2296
      %v2424 = vpack.c.b16 %v2299, %v2298
      %v2425 = vpack.c.b16 %v2301, %v2300
      %v2426 = vpack.c.b16 %v2303, %v2302
      %v2427 = vpack.c.b16 %v2305, %v2304
      %v2428 = vpack.c.b16 %v2307, %v2306
      %v2429 = vpack.c.b16 %v2309, %v2308
      %v2430 = vpack.c.b16 %v2311, %v2310
      %v2431 = vpack.c.b16 %v2313, %v2312
      %v2432 = vpack.c.b16 %v2315, %v2314
      %v2433 = vpack.c.b16 %v2317, %v2316
      %v2434 = vpack.c.b16 %v2319, %v2318
      %v2435 = vpack.c.b16 %v2321, %v2320
      %v2436 = vpack.c.b16 %v2323, %v2322
      %v2437 = vpack.c.b16 %v2325, %v2324
      %v2438 = vpack.c.b16 %v2327, %v2326
      %v2439 = vpack.c.b16 %v2329, %v2328
      %v2440 = vpack.c.b16 %v2331, %v2330
      %v2441 = vpack.c.b16 %v2333, %v2332
      %v2442 = vpack.c.b16 %v2335, %v2334
      %v2443 = vpack.c.b16 %v2337, %v2336
      %v2444 = vpack.c.b16 %v2339, %v2338
      %v2445 = vpack.c.b16 %v2341, %v2340
      %v2446 = vpack.c.b16 %v2343, %v2342
      %v2447 = vpack.c.b16 %v2345, %v2344
      %v2448 = vpack.c.b16 %v2347, %v2346
      %v2449 = vpack.c.b16 %v2349, %v2348
      %v2450 = vpack.c.b16 %v2351, %v2350
      %v2451 = vpack.c.b16 %v2353, %v2352
      %v2452 = vpack.c.b16 %v2355, %v2354
      %v2453 = vpack.c.b16 %v2357, %v2356
      %v2454 = vpack.c.b16 %v2359, %v2358
      %v2455 = vpack.c.b16 %v2361, %v2360
      %v2456 = vpack.c.b16 %v2363, %v2362
      %v2457 = vpack.c.b16 %v2365, %v2364
      %v2458 = vpack.c.b16 %v2367, %v2366
      %v2459 = vpack.c.b16 %v2369, %v2368
      %v2460 = vpack.c.b16 %v2371, %v2370
      %v2461 = vpack.c.b16 %v2373, %v2372
      %v2462 = vpack.c.b16 %v2375, %v2374
      %v2463 = vpack.c.b16 %v2377, %v2376
      %v2464 = vpack.c.b16 %v2379, %v2378
      %v2465 = vpack.c.b16 %v2381, %v2380
      %v2466 = vpack.c.b16 %v2383, %v2382
      %v2467 = vpack.c.b16 %v2385, %v2384
      %v2468 = vpack.c.b16 %v2387, %v2386
      %v2469 = vpack.c.b16 %v2389, %v2388
      %v2470 = vpack.c.b16 %v2391, %v2390
      %v2471 = vpack.c.b16 %v2393, %v2392
      %v2472 = vpack.c.b16 %v2395, %v2394
      %v2473 = vpack.c.b16 %v2397, %v2396
      %v2474 = vpack.c.b16 %v2399, %v2398
      %v2475 = vpack.c.b16 %v2401, %v2400
      %v2476 = vpack.c.b16 %v2403, %v2402
      %v2477 = vpack.c.b16 %v2405, %v2404
      %2550 = vmatpush.bf16.msra.mxu0 %v2413
      %2551 = vmatpush.bf16.msra.mxu0 %v2412
      %2552 = vmatpush.bf16.msra.mxu0 %v2411
      %2553 = vmatpush.bf16.msra.mxu0 %v2410
      %2554 = vmatpush.bf16.msra.mxu0 %v2409
      %2555 = vmatpush.bf16.msra.mxu0 %v2408
      %2556 = vmatpush.bf16.msra.mxu0 %v2407
      %2557 = vmatpush.bf16.msra.mxu0 %v2406
      %2558 = vmatmul.bf16.gmra.mxu0 %v1927
      %v2559 = vpop.f32.mrf.mxu0
      %v2560 = vadd.f32 %v2117, %v2559
      %v2561 = vpop.f32.mrf.mxu0
      %v2562 = vadd.f32 %v2117, %v2561
      %2563 = vmatmul.bf16.gmra.mxu0 %v1936
      %v2564 = vpop.f32.mrf.mxu0
      %v2565 = vadd.f32 %v2117, %v2564
      %v2566 = vpop.f32.mrf.mxu0
      %v2567 = vadd.f32 %v2117, %v2566
      %2568 = vmatmul.bf16.gmra.mxu0 %v1945
      %v2569 = vpop.f32.mrf.mxu0
      %v2570 = vadd.f32 %v2117, %v2569
      %v2571 = vpop.f32.mrf.mxu0
      %v2572 = vadd.f32 %v2117, %v2571
      %2573 = vmatmul.bf16.gmra.mxu0 %v1954
      %v2574 = vpop.f32.mrf.mxu0
      %v2575 = vadd.f32 %v2117, %v2574
      %v2576 = vpop.f32.mrf.mxu0
      %v2577 = vadd.f32 %v2117, %v2576
      %2578 = vmatmul.bf16.gmra.mxu0 %v1963
      %v2579 = vpop.f32.mrf.mxu0
      %v2580 = vadd.f32 %v2117, %v2579
      %v2581 = vpop.f32.mrf.mxu0
      %v2582 = vadd.f32 %v2117, %v2581
      %2583 = vdwg.mxu0
      %2584 = vmatpush.bf16.msra.mxu0 %v2421
      %2585 = vmatpush.bf16.msra.mxu0 %v2420
      %2586 = vmatpush.bf16.msra.mxu0 %v2419
      %2587 = vmatpush.bf16.msra.mxu0 %v2418
      %2588 = vmatpush.bf16.msra.mxu0 %v2417
      %2589 = vmatpush.bf16.msra.mxu0 %v2416
      %2590 = vmatpush.bf16.msra.mxu0 %v2415
      %2591 = vmatpush.bf16.msra.mxu0 %v2414
      %2592 = vmatmul.bf16.gmra.mxu0 %v1928
      %v2593 = vpop.f32.mrf.mxu0
      %v2594 = vadd.f32 %v2560, %v2593
      %v2595 = vpop.f32.mrf.mxu0
      %v2596 = vadd.f32 %v2562, %v2595
      %2597 = vmatmul.bf16.gmra.mxu0 %v1937
      %v2598 = vpop.f32.mrf.mxu0
      %v2599 = vadd.f32 %v2565, %v2598
      %v2600 = vpop.f32.mrf.mxu0
      %v2601 = vadd.f32 %v2567, %v2600
      %2602 = vmatmul.bf16.gmra.mxu0 %v1946
      %v2603 = vpop.f32.mrf.mxu0
      %v2604 = vadd.f32 %v2570, %v2603
      %v2605 = vpop.f32.mrf.mxu0
      %v2606 = vadd.f32 %v2572, %v2605
      %2607 = vmatmul.bf16.gmra.mxu0 %v1955
      %v2608 = vpop.f32.mrf.mxu0
      %v2609 = vadd.f32 %v2575, %v2608
      %v2610 = vpop.f32.mrf.mxu0
      %v2611 = vadd.f32 %v2577, %v2610
      %2612 = vmatmul.bf16.gmra.mxu0 %v1964
      %v2613 = vpop.f32.mrf.mxu0
      %v2614 = vadd.f32 %v2580, %v2613
      %v2615 = vpop.f32.mrf.mxu0
      %v2616 = vadd.f32 %v2582, %v2615
      %2617 = vdwg.mxu0
      %2618 = vmatpush.bf16.msra.mxu0 %v2429
      %2619 = vmatpush.bf16.msra.mxu0 %v2428
      %2620 = vmatpush.bf16.msra.mxu0 %v2427
      %2621 = vmatpush.bf16.msra.mxu0 %v2426
      %2622 = vmatpush.bf16.msra.mxu0 %v2425
      %2623 = vmatpush.bf16.msra.mxu0 %v2424
      %2624 = vmatpush.bf16.msra.mxu0 %v2423
      %2625 = vmatpush.bf16.msra.mxu0 %v2422
      %2626 = vmatmul.bf16.gmra.mxu0 %v1929
      %v2627 = vpop.f32.mrf.mxu0
      %v2628 = vadd.f32 %v2594, %v2627
      %v2629 = vpop.f32.mrf.mxu0
      %v2630 = vadd.f32 %v2596, %v2629
      %2631 = vmatmul.bf16.gmra.mxu0 %v1938
      %v2632 = vpop.f32.mrf.mxu0
      %v2633 = vadd.f32 %v2599, %v2632
      %v2634 = vpop.f32.mrf.mxu0
      %v2635 = vadd.f32 %v2601, %v2634
      %2636 = vmatmul.bf16.gmra.mxu0 %v1947
      %v2637 = vpop.f32.mrf.mxu0
      %v2638 = vadd.f32 %v2604, %v2637
      %v2639 = vpop.f32.mrf.mxu0
      %v2640 = vadd.f32 %v2606, %v2639
      %2641 = vmatmul.bf16.gmra.mxu0 %v1956
      %v2642 = vpop.f32.mrf.mxu0
      %v2643 = vadd.f32 %v2609, %v2642
      %v2644 = vpop.f32.mrf.mxu0
      %v2645 = vadd.f32 %v2611, %v2644
      %2646 = vmatmul.bf16.gmra.mxu0 %v1965
      %v2647 = vpop.f32.mrf.mxu0
      %v2648 = vadd.f32 %v2614, %v2647
      %v2649 = vpop.f32.mrf.mxu0
      %v2650 = vadd.f32 %v2616, %v2649
      %2651 = vdwg.mxu0
      %2652 = vmatpush.bf16.msra.mxu0 %v2437
      %2653 = vmatpush.bf16.msra.mxu0 %v2436
      %2654 = vmatpush.bf16.msra.mxu0 %v2435
      %2655 = vmatpush.bf16.msra.mxu0 %v2434
      %2656 = vmatpush.bf16.msra.mxu0 %v2433
      %2657 = vmatpush.bf16.msra.mxu0 %v2432
      %2658 = vmatpush.bf16.msra.mxu0 %v2431
      %2659 = vmatpush.bf16.msra.mxu0 %v2430
      %2660 = vmatmul.bf16.gmra.mxu0 %v1930
      %v2661 = vpop.f32.mrf.mxu0
      %v2662 = vadd.f32 %v2628, %v2661
      %v2663 = vpop.f32.mrf.mxu0
      %v2664 = vadd.f32 %v2630, %v2663
      %2665 = vmatmul.bf16.gmra.mxu0 %v1939
      %v2666 = vpop.f32.mrf.mxu0
      %v2667 = vadd.f32 %v2633, %v2666
      %v2668 = vpop.f32.mrf.mxu0
      %v2669 = vadd.f32 %v2635, %v2668
      %2670 = vmatmul.bf16.gmra.mxu0 %v1948
      %v2671 = vpop.f32.mrf.mxu0
      %v2672 = vadd.f32 %v2638, %v2671
      %v2673 = vpop.f32.mrf.mxu0
      %v2674 = vadd.f32 %v2640, %v2673
      %2675 = vmatmul.bf16.gmra.mxu0 %v1957
      %v2676 = vpop.f32.mrf.mxu0
      %v2677 = vadd.f32 %v2643, %v2676
      %v2678 = vpop.f32.mrf.mxu0
      %v2679 = vadd.f32 %v2645, %v2678
      %2680 = vmatmul.bf16.gmra.mxu0 %v1966
      %v2681 = vpop.f32.mrf.mxu0
      %v2682 = vadd.f32 %v2648, %v2681
      %v2683 = vpop.f32.mrf.mxu0
      %v2684 = vadd.f32 %v2650, %v2683
      %2685 = vdwg.mxu0
      %2686 = vmatpush.bf16.msra.mxu0 %v2445
      %2687 = vmatpush.bf16.msra.mxu0 %v2444
      %2688 = vmatpush.bf16.msra.mxu0 %v2443
      %2689 = vmatpush.bf16.msra.mxu0 %v2442
      %2690 = vmatpush.bf16.msra.mxu0 %v2441
      %2691 = vmatpush.bf16.msra.mxu0 %v2440
      %2692 = vmatpush.bf16.msra.mxu0 %v2439
      %2693 = vmatpush.bf16.msra.mxu0 %v2438
      %2694 = vmatmul.bf16.gmra.mxu0 %v1931
      %v2695 = vpop.f32.mrf.mxu0
      %v2696 = vadd.f32 %v2662, %v2695
      %v2697 = vpop.f32.mrf.mxu0
      %v2698 = vadd.f32 %v2664, %v2697
      %2699 = vmatmul.bf16.gmra.mxu0 %v1940
      %v2700 = vpop.f32.mrf.mxu0
      %v2701 = vadd.f32 %v2667, %v2700
      %v2702 = vpop.f32.mrf.mxu0
      %v2703 = vadd.f32 %v2669, %v2702
      %2704 = vmatmul.bf16.gmra.mxu0 %v1949
      %v2705 = vpop.f32.mrf.mxu0
      %v2706 = vadd.f32 %v2672, %v2705
      %v2707 = vpop.f32.mrf.mxu0
      %v2708 = vadd.f32 %v2674, %v2707
      %2709 = vmatmul.bf16.gmra.mxu0 %v1958
      %v2710 = vpop.f32.mrf.mxu0
      %v2711 = vadd.f32 %v2677, %v2710
      %v2712 = vpop.f32.mrf.mxu0
      %v2713 = vadd.f32 %v2679, %v2712
      %2714 = vmatmul.bf16.gmra.mxu0 %v1967
      %v2715 = vpop.f32.mrf.mxu0
      %v2716 = vadd.f32 %v2682, %v2715
      %v2717 = vpop.f32.mrf.mxu0
      %v2718 = vadd.f32 %v2684, %v2717
      %2719 = vdwg.mxu0
      %2720 = vmatpush.bf16.msra.mxu0 %v2453
      %2721 = vmatpush.bf16.msra.mxu0 %v2452
      %2722 = vmatpush.bf16.msra.mxu0 %v2451
      %2723 = vmatpush.bf16.msra.mxu0 %v2450
      %2724 = vmatpush.bf16.msra.mxu0 %v2449
      %2725 = vmatpush.bf16.msra.mxu0 %v2448
      %2726 = vmatpush.bf16.msra.mxu0 %v2447
      %2727 = vmatpush.bf16.msra.mxu0 %v2446
      %2728 = vmatmul.bf16.gmra.mxu0 %v1932
      %v2729 = vpop.f32.mrf.mxu0
      %v2730 = vadd.f32 %v2696, %v2729
      %v2731 = vpop.f32.mrf.mxu0
      %v2732 = vadd.f32 %v2698, %v2731
      %2733 = vmatmul.bf16.gmra.mxu0 %v1941
      %v2734 = vpop.f32.mrf.mxu0
      %v2735 = vadd.f32 %v2701, %v2734
      %v2736 = vpop.f32.mrf.mxu0
      %v2737 = vadd.f32 %v2703, %v2736
      %2738 = vmatmul.bf16.gmra.mxu0 %v1950
      %v2739 = vpop.f32.mrf.mxu0
      %v2740 = vadd.f32 %v2706, %v2739
      %v2741 = vpop.f32.mrf.mxu0
      %v2742 = vadd.f32 %v2708, %v2741
      %2743 = vmatmul.bf16.gmra.mxu0 %v1959
      %v2744 = vpop.f32.mrf.mxu0
      %v2745 = vadd.f32 %v2711, %v2744
      %v2746 = vpop.f32.mrf.mxu0
      %v2747 = vadd.f32 %v2713, %v2746
      %2748 = vmatmul.bf16.gmra.mxu0 %v1968
      %v2749 = vpop.f32.mrf.mxu0
      %v2750 = vadd.f32 %v2716, %v2749
      %v2751 = vpop.f32.mrf.mxu0
      %v2752 = vadd.f32 %v2718, %v2751
      %2753 = vdwg.mxu0
      %2754 = vmatpush.bf16.msra.mxu0 %v2461
      %2755 = vmatpush.bf16.msra.mxu0 %v2460
      %2756 = vmatpush.bf16.msra.mxu0 %v2459
      %2757 = vmatpush.bf16.msra.mxu0 %v2458
      %2758 = vmatpush.bf16.msra.mxu0 %v2457
      %2759 = vmatpush.bf16.msra.mxu0 %v2456
      %2760 = vmatpush.bf16.msra.mxu0 %v2455
      %2761 = vmatpush.bf16.msra.mxu0 %v2454
      %2762 = vmatmul.bf16.gmra.mxu0 %v1933
      %v2763 = vpop.f32.mrf.mxu0
      %v2764 = vadd.f32 %v2730, %v2763
      %v2765 = vpop.f32.mrf.mxu0
      %v2766 = vadd.f32 %v2732, %v2765
      %2767 = vmatmul.bf16.gmra.mxu0 %v1942
      %v2768 = vpop.f32.mrf.mxu0
      %v2769 = vadd.f32 %v2735, %v2768
      %v2770 = vpop.f32.mrf.mxu0
      %v2771 = vadd.f32 %v2737, %v2770
      %2772 = vmatmul.bf16.gmra.mxu0 %v1951
      %v2773 = vpop.f32.mrf.mxu0
      %v2774 = vadd.f32 %v2740, %v2773
      %v2775 = vpop.f32.mrf.mxu0
      %v2776 = vadd.f32 %v2742, %v2775
      %2777 = vmatmul.bf16.gmra.mxu0 %v1960
      %v2778 = vpop.f32.mrf.mxu0
      %v2779 = vadd.f32 %v2745, %v2778
      %v2780 = vpop.f32.mrf.mxu0
      %v2781 = vadd.f32 %v2747, %v2780
      %2782 = vmatmul.bf16.gmra.mxu0 %v1969
      %v2783 = vpop.f32.mrf.mxu0
      %v2784 = vadd.f32 %v2750, %v2783
      %v2785 = vpop.f32.mrf.mxu0
      %v2786 = vadd.f32 %v2752, %v2785
      %2787 = vdwg.mxu0
      %2788 = vmatpush.bf16.msra.mxu0 %v2469
      %2789 = vmatpush.bf16.msra.mxu0 %v2468
      %2790 = vmatpush.bf16.msra.mxu0 %v2467
      %2791 = vmatpush.bf16.msra.mxu0 %v2466
      %2792 = vmatpush.bf16.msra.mxu0 %v2465
      %2793 = vmatpush.bf16.msra.mxu0 %v2464
      %2794 = vmatpush.bf16.msra.mxu0 %v2463
      %2795 = vmatpush.bf16.msra.mxu0 %v2462
      %2796 = vmatmul.bf16.gmra.mxu0 %v1934
      %v2797 = vpop.f32.mrf.mxu0
      %v2798 = vadd.f32 %v2764, %v2797
      %v2799 = vpop.f32.mrf.mxu0
      %v2800 = vadd.f32 %v2766, %v2799
      %2801 = vmatmul.bf16.gmra.mxu0 %v1943
      %v2802 = vpop.f32.mrf.mxu0
      %v2803 = vadd.f32 %v2769, %v2802
      %v2804 = vpop.f32.mrf.mxu0
      %v2805 = vadd.f32 %v2771, %v2804
      %2806 = vmatmul.bf16.gmra.mxu0 %v1952
      %v2807 = vpop.f32.mrf.mxu0
      %v2808 = vadd.f32 %v2774, %v2807
      %v2809 = vpop.f32.mrf.mxu0
      %v2810 = vadd.f32 %v2776, %v2809
      %2811 = vmatmul.bf16.gmra.mxu0 %v1961
      %v2812 = vpop.f32.mrf.mxu0
      %v2813 = vadd.f32 %v2779, %v2812
      %v2814 = vpop.f32.mrf.mxu0
      %v2815 = vadd.f32 %v2781, %v2814
      %2816 = vmatmul.bf16.gmra.mxu0 %v1970
      %v2817 = vpop.f32.mrf.mxu0
      %v2818 = vadd.f32 %v2784, %v2817
      %v2819 = vpop.f32.mrf.mxu0
      %v2820 = vadd.f32 %v2786, %v2819
      %2821 = vdwg.mxu0
      %2822 = vmatpush.bf16.msra.mxu0 %v2477
      %2823 = vmatpush.bf16.msra.mxu0 %v2476
      %2824 = vmatpush.bf16.msra.mxu0 %v2475
      %2825 = vmatpush.bf16.msra.mxu0 %v2474
      %2826 = vmatpush.bf16.msra.mxu0 %v2473
      %2827 = vmatpush.bf16.msra.mxu0 %v2472
      %2828 = vmatpush.bf16.msra.mxu0 %v2471
      %2829 = vmatpush.bf16.msra.mxu0 %v2470
      %2830 = vmatmul.bf16.gmra.mxu0 %v1935
      %v2831 = vpop.f32.mrf.mxu0
      %v2832 = vadd.f32 %v2798, %v2831
      %v2833 = vpop.f32.mrf.mxu0
      %v2834 = vadd.f32 %v2800, %v2833
      %2835 = vmatmul.bf16.gmra.mxu0 %v1944
      %v2836 = vpop.f32.mrf.mxu0
      %v2837 = vadd.f32 %v2803, %v2836
      %v2838 = vpop.f32.mrf.mxu0
      %v2839 = vadd.f32 %v2805, %v2838
      %2840 = vmatmul.bf16.gmra.mxu0 %v1953
      %v2841 = vpop.f32.mrf.mxu0
      %v2842 = vadd.f32 %v2808, %v2841
      %v2843 = vpop.f32.mrf.mxu0
      %v2844 = vadd.f32 %v2810, %v2843
      %2845 = vmatmul.bf16.gmra.mxu0 %v1962
      %v2846 = vpop.f32.mrf.mxu0
      %v2847 = vadd.f32 %v2813, %v2846
      %v2848 = vpop.f32.mrf.mxu0
      %v2849 = vadd.f32 %v2815, %v2848
      %2850 = vmatmul.bf16.gmra.mxu0 %v1971
      %v2851 = vpop.f32.mrf.mxu0
      %v2852 = vadd.f32 %v2818, %v2851
      %v2853 = vpop.f32.mrf.mxu0
      %v2854 = vadd.f32 %v2820, %v2853
      %2855 = vdwg.mxu0
      %v2856 = vmax.f32 %v2832, 0.0
      %v2857 = vmax.f32 %v2834, 0.0
      %v2858 = vmax.f32 %v2837, 0.0
      %v2859 = vmax.f32 %v2839, 0.0
      %v2860 = vmax.f32 %v2842, 0.0
      %v2861 = vmax.f32 %v2844, 0.0
      %v2862 = vmax.f32 %v2847, 0.0
      %v2863 = vmax.f32 %v2849, 0.0
      %v2864 = vmax.f32 %v2852, 0.0
      %v2865 = vmax.f32 %v2854, 0.0
      %v2866 = vpack.c.bf16 %v2856, %v2856
      %v2867 = vpack.c.bf16 %v2857, %v2857
      %v2868 = vpack.c.bf16 %v2858, %v2858
      %v2869 = vpack.c.bf16 %v2859, %v2859
      %v2870 = vpack.c.bf16 %v2860, %v2860
      %v2871 = vpack.c.bf16 %v2861, %v2861
      %v2872 = vpack.c.bf16 %v2862, %v2862
      %v2873 = vpack.c.bf16 %v2863, %v2863
      %v2874 = vpack.c.bf16 %v2864, %v2864
      %v2875 = vpack.c.bf16 %v2865, %v2865
      %2876 = vst [vmem:[%s251] sm:$0xf] %v2866
      %2877 = vst [vmem:[%s251 + $0x4] sm:$0xf] %v2867
      %2878 = vst [vmem:[%s251 + $0x8] sm:$0xf] %v2868
      %2879 = vst [vmem:[%s251 + $0xc] sm:$0xf] %v2869
      %2880 = vst [vmem:[%s251 + $0x10] sm:$0xf] %v2870
      %2881 = vst [vmem:[%s251 + $0x14] sm:$0xf] %v2871
      %2882 = vst [vmem:[%s251 + $0x18] sm:$0xf] %v2872
      %2883 = vst [vmem:[%s251 + $0x1c] sm:$0xf] %v2873
      %2884 = vst [vmem:[%s251 + $0x20] sm:$0xf] %v2874
      %2885 = vst [vmem:[%s251 + $0x24] sm:$0xf] %v2875
      %p2886 = scmp.lt.s32.totalorder %s17, 1
      %s2887 = scalar_select %p2886, %s17, 1
      %s2888 = smul.addr %s2887, 10
      %s2889 = smul.addr %s2888, 4
      %s2890 = scalar_lea.vmem %s6, %s2889
      // Predicated region
      $region45: #{downblock_forward.1} parent=43 // pred_check
        %p2891 = pneg %p166
      $region46: #{downblock_forward.1} parent=43 // pred_check_branch
        %2893 = sbr.rel (%p2891) target = $region48
      $region47: #{downblock_forward.1} parent=43 // pred_region
        _
      $region48: #{downblock_forward.1} parent=43 // pred_fallthru
        _
    $region44: #{downblock_forward.1} parent=5 // pred_fallthru
      _
    %p2894 = scmp.le.s32.totalorder 2, %s12
    // Predicated region
    $region49: #{downblock_forward.1} parent=5 // pred_check
      %p2895 = pneg %p2894
    $region50: #{downblock_forward.1} parent=5 // pred_check_branch
      %2897 = sbr.rel (%p2895) target = $region52
    $region51: #{downblock_forward.1} parent=5 // pred_region
      %s2898 = ssub.s32 %s12, 2
      // Predicated region
      $region53: #{downblock_forward.1} parent=51 // pred_check
        %p2899 = pneg %p172
      $region54: #{downblock_forward.1} parent=51 // pred_check_branch
        %2901 = sbr.rel (%p2899) target = $region56
      $region55: #{downblock_forward.1} parent=51 // pred_region
        %p2902 = scmp.lt.s32.totalorder %s18, 1
        %s2903 = scalar_select %p2902, %s18, 1
        %s2904 = smul.addr %s2903, 10
        %s2905 = smul.addr %s2904, 4
        %s2906 = scalar_lea.vmem %s6, %s2905
      $region56: #{downblock_forward.1} parent=51 // pred_fallthru
        _
    $region52: #{downblock_forward.1} parent=5 // pred_fallthru
      _
  $region6: #{downblock_forward.1} parent=0 // loop_footer
    %s16 = sadd.s32 1, %s12
  $region7: #{downblock_forward.1} parent=0 // loop_footer_branch
    %11 = sbr.rel target = $region3
  $region8: #{downblock_forward.1} parent=0 // loop_exit
    _

</llo_original>
